<compile_context>
chip_gen: v7x
topology: tpu7x:2x2x1
jax: 0.10.0
libtpu: 0.0.40
codegen_flags: <defaults>
</compile_context>

<pallas_src>
import functools

import jax
import jax.numpy as jnp
from jax.experimental import pallas as pl
from jax.experimental.pallas import tpu as pltpu


OUT_CHANNELS = 256


# ---------------------------------------------------------------------------
# Kernels
# ---------------------------------------------------------------------------

def _project_kernel(x_ref, w_ref, b_ref, o_ref, *, n_blk):
    """Simple path: full C_in resident per step.

    x_ref: (n_blk, C_in, t_hw)  activation slab in native NCHW layout
    w_ref: (C_in, 256)          resident weight (conv weight transposed)
    b_ref: (1, 256)             f32 bias row
    o_ref: (n_blk, t_hw, 256)   lane-dense output tile
    """
    w = w_ref[...]
    b = b_ref[...]
    # TODO(synk): on v6e verify with pl.lower_as_mlir that this trans-A
    # contraction does not insert a per-tile XLU transpose for packed (bf16)
    # LHS; if it does, stage the slab through a (t_hw, C_in) VMEM scratch.
    for i in range(n_blk):                      # static unroll, n_blk <= 8
        acc = jax.lax.dot_general(
            x_ref[i], w,
            dimension_numbers=(((0,), (0,)), ((), ())),   # contract C (trans-A)
            preferred_element_type=jnp.float32,
        )
        o_ref[i] = (acc + b).astype(o_ref.dtype)


def _project_kernel_ktiled(x_ref, w_ref, b_ref, o_ref, acc_ref, *,
                           n_blk, c_in, tk, ragged_k):
    """K-tiled path for very large C_in (keeps the big lane-dense out tile).

    Grid axis 2 walks C_in in tk chunks (reduction axis, "arbitrary"); the
    f32 VMEM accumulator is zeroed at k==0 and flushed at k==last.  Ragged K
    tails are masked to zero (OOB block contents are unspecified).
    """
    k = pl.program_id(2)

    @pl.when(k == 0)
    def _():
        acc_ref[...] = jnp.zeros_like(acc_ref)

    w = w_ref[...]
    if ragged_k:
        row = jax.lax.broadcasted_iota(jnp.int32, (tk, 1), 0) + k * tk
        valid = row < c_in
        w = jnp.where(valid, w, jnp.zeros_like(w))

    for i in range(n_blk):                      # static unroll
        xi = x_ref[i]
        if ragged_k:
            xi = jnp.where(valid, xi, jnp.zeros_like(xi))
        acc_ref[i] += jax.lax.dot_general(
            xi, w,
            dimension_numbers=(((0,), (0,)), ((), ())),
            preferred_element_type=jnp.float32,
        )

    @pl.when(k == pl.num_programs(2) - 1)
    def _():
        o_ref[...] = (acc_ref[...] + b_ref[...]).astype(o_ref.dtype)


# ---------------------------------------------------------------------------
# Tiling helpers
# ---------------------------------------------------------------------------

def _round_down_128(x):
    return max(128, (x // 128) * 128)


def _physical_vmem_bytes():
    """Generation-aware physical VMEM (128 MiB v5e/v6e, 64 MiB per-TC v7x)."""
    try:
        info = pltpu.get_tpu_info()
        cap = getattr(info, "vmem_capacity_bytes", None)
        if cap:
            return int(cap)
    except Exception:
        pass
    return 64 * 1024 * 1024      # most conservative (v7x per-TensorCore)


def _vmem_bytes(n_blk, c_blk, t_hw, x_esz, w_esz, o_esz, k_tiled):
    """Conservative double-buffered VMEM estimate (dtype-aware)."""
    c_pad = max(8, -(-c_blk // 8) * 8)
    x_buf = 2 * n_blk * c_pad * t_hw * x_esz
    w_buf = 2 * c_pad * OUT_CHANNELS * w_esz
    b_buf = 2 * 8 * OUT_CHANNELS * 4
    o_buf = 2 * n_blk * t_hw * OUT_CHANNELS * o_esz
    acc_buf = n_blk * t_hw * OUT_CHANNELS * 4 if k_tiled else 0
    return x_buf + w_buf + b_buf + o_buf + acc_buf


# ---------------------------------------------------------------------------
# Forward wrapper
# ---------------------------------------------------------------------------

@functools.partial(jax.jit, static_argnames=("tm", "tk", "out_dtype"))
def project_forward(f0_nchw, weight, bias, *, tm=1024, tk=None, out_dtype=None):
    """Forward pass of Project.

    f0_nchw: (N, feats, H, W) with N = B*8  (PyTorch NCHW layout)
    weight : (256, feats)  -- Conv2d 1x1 weight squeezed over kH,kW
    bias   : (256,)
    tk     : optional forced K-tile size (channels); None = auto
    returns: (B, 8*H*W, 256)
    """
    N, C_in, H, W = f0_nchw.shape
    assert N % 8 == 0, "leading dim must be divisible by s=8"
    B = N // 8
    HW = H * W

    act_dtype = f0_nchw.dtype
    out_dtype = act_dtype if out_dtype is None else jnp.dtype(out_dtype)

    # Free reshape: NCHW -> (N, C_in, HW); channel transpose is fused into the
    # kernel's trans-A contraction, so there is no extra HBM pass.
    x = f0_nchw.reshape(N, C_in, HW)
    # Keep the MXU on the activation-dtype path (no silent f32 promotion).
    w_t = weight.T.astype(act_dtype)                       # (C_in, 256)
    # Bias stays f32: it is added to the f32 accumulator; cost is negligible.
    b_row = bias.astype(jnp.float32).reshape(1, OUT_CHANNELS)

    x_esz = jnp.dtype(act_dtype).itemsize
    w_esz = x_esz
    o_esz = jnp.dtype(out_dtype).itemsize

    # ---- generation-aware VMEM budget -------------------------------------
    phys_vmem = _physical_vmem_bytes()
    vmem_cap = (phys_vmem * 3) // 4      # ~48 MiB on v7x, ~96 MiB on v5e/v6e

    # ---- choose (n_blk, t_hw): ~512-1024-row lane-dense output tiles ------
    if HW >= tm:
        n_blk, t_hw = 1, _round_down_128(tm)
    else:
        t_hw = HW
        n_blk = 1
        for d in (8, 4, 2):
            # keep >=2 steps on the leading axis so megacore can shard (v7x)
            if N % d == 0 and d * HW <= tm and N // d >= 2:
                n_blk = d
                break

    # ---- choose K tiling: prefer K-tiling over shrinking the pixel tile ---
    if tk is not None and tk < C_in:
        c_blk, k_tiled = int(tk), True
    else:
        c_blk, k_tiled = C_in, False
        if _vmem_bytes(n_blk, C_in, t_hw, x_esz, w_esz, o_esz, False) > vmem_cap:
            for cand in (512, 256, 128):
                if cand < C_in and _vmem_bytes(n_blk, cand, t_hw, x_esz, w_esz,
                                               o_esz, True) <= vmem_cap:
                    c_blk, k_tiled = cand, True
                    break

    # Defensive fallback (realistically never hit): shrink batching / tile.
    while _vmem_bytes(n_blk, c_blk, t_hw, x_esz, w_esz, o_esz, k_tiled) > vmem_cap:
        if n_blk > 1:
            n_blk //= 2
        elif t_hw > 128:
            t_hw = _round_down_128(max(128, t_hw // 2))
        else:
            break

    n_hw = pl.cdiv(HW, t_hw)
    n_img = N // n_blk
    vmem_needed = _vmem_bytes(n_blk, c_blk, t_hw, x_esz, w_esz, o_esz, k_tiled)
    vmem_limit = int(min(max(vmem_needed + (8 << 20), 32 << 20),
                         phys_vmem - (12 << 20)))

    if k_tiled:
        n_k = pl.cdiv(C_in, c_blk)
        ragged_k = (C_in % c_blk) != 0
        kernel = functools.partial(_project_kernel_ktiled, n_blk=n_blk,
                                   c_in=C_in, tk=c_blk, ragged_k=ragged_k)
        grid = (n_img, n_hw, n_k)
        in_specs = [
            pl.BlockSpec((n_blk, c_blk, t_hw), lambda nb, j, k: (nb, k, j)),
            pl.BlockSpec((c_blk, OUT_CHANNELS), lambda nb, j, k: (k, 0)),
            pl.BlockSpec((1, OUT_CHANNELS), lambda nb, j, k: (0, 0)),
        ]
        out_specs = pl.BlockSpec((n_blk, t_hw, OUT_CHANNELS),
                                 lambda nb, j, k: (nb, j, 0))
        scratch_shapes = [pltpu.VMEM((n_blk, t_hw, OUT_CHANNELS), jnp.float32)]
        dims = ("parallel", "parallel", "arbitrary")
    else:
        kernel = functools.partial(_project_kernel, n_blk=n_blk)
        grid = (n_img, n_hw)
        in_specs = [
            pl.BlockSpec((n_blk, C_in, t_hw), lambda nb, j: (nb, 0, j)),
            pl.BlockSpec((C_in, OUT_CHANNELS), lambda nb, j: (0, 0)),
            pl.BlockSpec((1, OUT_CHANNELS), lambda nb, j: (0, 0)),
        ]
        out_specs = pl.BlockSpec((n_blk, t_hw, OUT_CHANNELS),
                                 lambda nb, j: (nb, j, 0))
        scratch_shapes = []
        dims = ("parallel", "parallel")

    out = pl.pallas_call(
        kernel,
        out_shape=jax.ShapeDtypeStruct((N, HW, OUT_CHANNELS), out_dtype),
        grid_spec=pltpu.PrefetchScalarGridSpec(
            num_scalar_prefetch=0,
            grid=grid,
            in_specs=in_specs,
            out_specs=out_specs,
            scratch_shapes=scratch_shapes,
        ),
        compiler_params=pltpu.CompilerParams(
            dimension_semantics=dims,
            vmem_limit_bytes=vmem_limit,
        ),
    )(x, w_t, b_row)

    # (N, HW, 256) row-major == (B, 8*HW, 256) row-major -> free reshape.
    # This matches rearrange('(b s) c h w -> b (s h w) c').
    return out.reshape(B, 8 * HW, OUT_CHANNELS)


# ---------------------------------------------------------------------------
# Reference + params
# ---------------------------------------------------------------------------

def init_params(key, feats):
    """Deterministic Conv2d(feats, 256, k=1) parameter init (kaiming-uniform-like)."""
    kw, kb = jax.random.split(key)
    bound = 1.0 / jnp.sqrt(feats)          # kernel_size = 1 -> fan_in = feats
    weight = jax.random.uniform(kw, (OUT_CHANNELS, feats), jnp.float32,
                                minval=-bound, maxval=bound)
    bias = jax.random.uniform(kb, (OUT_CHANNELS,), jnp.float32,
                              minval=-bound, maxval=bound)
    return weight, bias


def reference(f0, weight, bias):
    """Plain-JAX 1x1 conv + rearrange (f32, highest precision)."""
    N, _, H, W = f0.shape
    B = N // 8
    y = jnp.einsum("nchw,oc->nohw", f0, weight,
                   precision=jax.lax.Precision.HIGHEST)
    y = y + bias[None, :, None, None]
    return jnp.transpose(y, (0, 2, 3, 1)).reshape(B, 8 * H * W, OUT_CHANNELS)


if __name__ == "__main__":
    key = jax.random.PRNGKey(0)
    k_in, k_param, k_in2, k_param2 = jax.random.split(key, 4)

    # ---- test 1: nominal small config (f32, simple path, image batching) --
    feats = 4
    B, S, H, W = 2, 8, 16, 16
    N = B * S
    f0 = jax.random.normal(k_in, (N, feats, H, W), dtype=jnp.float32)
    weight, bias = init_params(k_param, feats)

    out = jax.block_until_ready(project_forward(f0, weight, bias))
    ref = reference(f0, weight, bias)
    assert out.shape == (B, S * H * W, OUT_CHANNELS)
    assert jnp.allclose(out, ref, atol=1e-3, rtol=1e-3)

    # ---- test 2: larger C_in, forced K-tiling with ragged masked tail -----
    feats2, N2, H2, W2 = 320, 8, 8, 8
    f1 = jax.random.normal(k_in2, (N2, feats2, H2, W2), dtype=jnp.float32)
    weight2, bias2 = init_params(k_param2, feats2)
    out2 = jax.block_until_ready(project_forward(f1, weight2, bias2, tk=128))
    ref2 = reference(f1, weight2, bias2)
    assert out2.shape == (N2 // 8, 8 * H2 * W2, OUT_CHANNELS)
    assert jnp.allclose(out2, ref2, atol=5e-3, rtol=5e-3)

    # ---- test 3: bf16 activation path (weights cast inside the wrapper) ---
    f0_bf = f0.astype(jnp.bfloat16)
    out_bf = jax.block_until_ready(project_forward(f0_bf, weight, bias))
    ref_bf = reference(f0_bf.astype(jnp.float32),
                       weight.astype(jnp.bfloat16).astype(jnp.float32), bias)
    assert out_bf.dtype == jnp.bfloat16
    assert jnp.allclose(out_bf.astype(jnp.float32), ref_bf, atol=3e-2, rtol=3e-2)

    print("KERNEL_OK")
</pallas_src>

<mosaic_0001>
module attributes {stable_mosaic.version = 11 : i64} {
  func.func @_project_kernel(%arg0: i32, %arg1: i32, %arg2: memref<4x4x256xf32, #tpu.memory_space<vmem>>, %arg3: memref<4x256xf32, #tpu.memory_space<vmem>>, %arg4: memref<1x256xf32, #tpu.memory_space<vmem>>, %arg5: memref<4x256x256xf32, #tpu.memory_space<vmem>>) attributes {dimension_semantics = [#tpu.dimension_semantics<parallel>, #tpu.dimension_semantics<parallel>], iteration_bounds = array<i64: 4, 1>, scalar_prefetch = 0 : i64, scratch_operands = 0 : i64, tpu.core_type = #tpu.core_type<tc>, window_params = [{transform_indices = @transform_0, window_bounds = array<i64: 4, 4, 256>}, {pipeline_mode = #tpu.pipeline_mode<synchronous>, transform_indices = @transform_1, window_bounds = array<i64: 4, 256>}, {pipeline_mode = #tpu.pipeline_mode<synchronous>, transform_indices = @transform_2, window_bounds = array<i64: 1, 256>}, {transform_indices = @transform_3, window_bounds = array<i64: 4, 256, 256>}]} {
    %c0 = arith.constant 0 : index
    %c0_0 = arith.constant 0 : index
    %0 = vector.load %arg3[%c0, %c0_0] : memref<4x256xf32, #tpu.memory_space<vmem>>, vector<4x256xf32>
    %c0_1 = arith.constant 0 : index
    %c0_2 = arith.constant 0 : index
    %1 = vector.load %arg4[%c0_1, %c0_2] : memref<1x256xf32, #tpu.memory_space<vmem>>, vector<1x256xf32>
    %c0_3 = arith.constant 0 : index
    %c0_4 = arith.constant 0 : index
    %c0_5 = arith.constant 0 : index
    %2 = vector.load %arg2[%c0_3, %c0_4, %c0_5] : memref<4x4x256xf32, #tpu.memory_space<vmem>>, vector<1x4x256xf32>
    %3 = vector.shape_cast %2 : vector<1x4x256xf32> to vector<4x256xf32>
    %cst = arith.constant dense<0.000000e+00> : vector<256x256xf32>
    %4 = tpu.matmul %3, %0, %cst {dimension_numbers = #tpu.dot_dimension_numbers<[0], [0], [1], [1], [0, 1, 1, 1], [], []>} : vector<4x256xf32>, vector<4x256xf32>, vector<256x256xf32> -> vector<256x256xf32>
    %5 = vector.broadcast %1 : vector<1x256xf32> to vector<256x256xf32>
    %6 = arith.addf %4, %5 : vector<256x256xf32>
    %c0_6 = arith.constant 0 : index
    %c0_7 = arith.constant 0 : index
    %c0_8 = arith.constant 0 : index
    %7 = vector.load %arg5[%c0_6, %c0_7, %c0_8] : memref<4x256x256xf32, #tpu.memory_space<vmem>>, vector<1x256x256xf32>
    %8 = vector.shape_cast %7 : vector<1x256x256xf32> to vector<256x256xf32>
    %9 = vector.shape_cast %6 : vector<256x256xf32> to vector<1x256x256xf32>
    tpu.vector_store %arg5[%c0_6, %c0_7, %c0_8], %9 {strides = array<i32>} : memref<4x256x256xf32, #tpu.memory_space<vmem>>, vector<1x256x256xf32>,
    %c1 = arith.constant 1 : index
    %c0_9 = arith.constant 0 : index
    %c0_10 = arith.constant 0 : index
    %10 = vector.load %arg2[%c1, %c0_9, %c0_10] : memref<4x4x256xf32, #tpu.memory_space<vmem>>, vector<1x4x256xf32>
    %11 = vector.shape_cast %10 : vector<1x4x256xf32> to vector<4x256xf32>
    %cst_11 = arith.constant dense<0.000000e+00> : vector<256x256xf32>
    %12 = tpu.matmul %11, %0, %cst_11 {dimension_numbers = #tpu.dot_dimension_numbers<[0], [0], [1], [1], [0, 1, 1, 1], [], []>} : vector<4x256xf32>, vector<4x256xf32>, vector<256x256xf32> -> vector<256x256xf32>
    %13 = vector.broadcast %1 : vector<1x256xf32> to vector<256x256xf32>
    %14 = arith.addf %12, %13 : vector<256x256xf32>
    %c1_12 = arith.constant 1 : index
    %c0_13 = arith.constant 0 : index
    %c0_14 = arith.constant 0 : index
    %15 = vector.load %arg5[%c1_12, %c0_13, %c0_14] : memref<4x256x256xf32, #tpu.memory_space<vmem>>, vector<1x256x256xf32>
    %16 = vector.shape_cast %15 : vector<1x256x256xf32> to vector<256x256xf32>
    %17 = vector.shape_cast %14 : vector<256x256xf32> to vector<1x256x256xf32>
    tpu.vector_store %arg5[%c1_12, %c0_13, %c0_14], %17 {strides = array<i32>} : memref<4x256x256xf32, #tpu.memory_space<vmem>>, vector<1x256x256xf32>,
    %c2 = arith.constant 2 : index
    %c0_15 = arith.constant 0 : index
    %c0_16 = arith.constant 0 : index
    %18 = vector.load %arg2[%c2, %c0_15, %c0_16] : memref<4x4x256xf32, #tpu.memory_space<vmem>>, vector<1x4x256xf32>
    %19 = vector.shape_cast %18 : vector<1x4x256xf32> to vector<4x256xf32>
    %cst_17 = arith.constant dense<0.000000e+00> : vector<256x256xf32>
    %20 = tpu.matmul %19, %0, %cst_17 {dimension_numbers = #tpu.dot_dimension_numbers<[0], [0], [1], [1], [0, 1, 1, 1], [], []>} : vector<4x256xf32>, vector<4x256xf32>, vector<256x256xf32> -> vector<256x256xf32>
    %21 = vector.broadcast %1 : vector<1x256xf32> to vector<256x256xf32>
    %22 = arith.addf %20, %21 : vector<256x256xf32>
    %c2_18 = arith.constant 2 : index
    %c0_19 = arith.constant 0 : index
    %c0_20 = arith.constant 0 : index
    %23 = vector.load %arg5[%c2_18, %c0_19, %c0_20] : memref<4x256x256xf32, #tpu.memory_space<vmem>>, vector<1x256x256xf32>
    %24 = vector.shape_cast %23 : vector<1x256x256xf32> to vector<256x256xf32>
    %25 = vector.shape_cast %22 : vector<256x256xf32> to vector<1x256x256xf32>
    tpu.vector_store %arg5[%c2_18, %c0_19, %c0_20], %25 {strides = array<i32>} : memref<4x256x256xf32, #tpu.memory_space<vmem>>, vector<1x256x256xf32>,
    %c3 = arith.constant 3 : index
    %c0_21 = arith.constant 0 : index
    %c0_22 = arith.constant 0 : index
    %26 = vector.load %arg2[%c3, %c0_21, %c0_22] : memref<4x4x256xf32, #tpu.memory_space<vmem>>, vector<1x4x256xf32>
    %27 = vector.shape_cast %26 : vector<1x4x256xf32> to vector<4x256xf32>
    %cst_23 = arith.constant dense<0.000000e+00> : vector<256x256xf32>
    %28 = tpu.matmul %27, %0, %cst_23 {dimension_numbers = #tpu.dot_dimension_numbers<[0], [0], [1], [1], [0, 1, 1, 1], [], []>} : vector<4x256xf32>, vector<4x256xf32>, vector<256x256xf32> -> vector<256x256xf32>
    %29 = vector.broadcast %1 : vector<1x256xf32> to vector<256x256xf32>
    %30 = arith.addf %28, %29 : vector<256x256xf32>
    %c3_24 = arith.constant 3 : index
    %c0_25 = arith.constant 0 : index
    %c0_26 = arith.constant 0 : index
    %31 = vector.load %arg5[%c3_24, %c0_25, %c0_26] : memref<4x256x256xf32, #tpu.memory_space<vmem>>, vector<1x256x256xf32>
    %32 = vector.shape_cast %31 : vector<1x256x256xf32> to vector<256x256xf32>
    %33 = vector.shape_cast %30 : vector<256x256xf32> to vector<1x256x256xf32>
    tpu.vector_store %arg5[%c3_24, %c0_25, %c0_26], %33 {strides = array<i32>} : memref<4x256x256xf32, #tpu.memory_space<vmem>>, vector<1x256x256xf32>,
    return
  }
  func.func @transform_0(%arg0: i32, %arg1: i32) -> (i32, i32, i32) {
    %c0_i32 = arith.constant 0 : i32
    %c0_i32_0 = arith.constant 0 : i32
    return %arg0, %c0_i32, %arg1 : i32, i32, i32
  }
  func.func @transform_1(%arg0: i32, %arg1: i32) -> (i32, i32) {
    %c0_i32 = arith.constant 0 : i32
    %c0_i32_0 = arith.constant 0 : i32
    %c0_i32_1 = arith.constant 0 : i32
    return %c0_i32, %c0_i32_0 : i32, i32
  }
  func.func @transform_2(%arg0: i32, %arg1: i32) -> (i32, i32) {
    %c0_i32 = arith.constant 0 : i32
    %c0_i32_0 = arith.constant 0 : i32
    %c0_i32_1 = arith.constant 0 : i32
    return %c0_i32, %c0_i32_0 : i32, i32
  }
  func.func @transform_3(%arg0: i32, %arg1: i32) -> (i32, i32, i32) {
    %c0_i32 = arith.constant 0 : i32
    %c0_i32_0 = arith.constant 0 : i32
    return %arg0, %arg1, %c0_i32 : i32, i32, i32
  }
}

</mosaic_0001>

<llo_original>
// kernel: project_forward.1
$region0: #{project_forward.1}
  #allocation0 [shape = 'u32[]', space=smem, size = 0x4, offset = 0x4, fixed_abs, tag = 'smem constant byte address 0x4 - core index']
  #allocation1 [shape = 'u32[144,128]{1,0:T(1,128)}', space=vmem, size = 0x12000, scoped, tag = 'internal scratch']
  %s0 = inlined_call_operand.vmem [shape: f32[16,4,256], index: 0, kind: input, shape index: {}]
  %s1 = inlined_call_operand.hbm [shape: f32[4,256], index: 1, kind: input, shape index: {}]
  %s2 = inlined_call_operand.hbm [shape: f32[1,256], index: 2, kind: input, shape index: {}]
  %s3 = inlined_call_operand.hbm [shape: f32[16,256,256], index: 3, kind: output, shape index: {}]
  %s4 = sld [smem:[#allocation0]]
  $region53: #{project_forward.1} parent=0
    _
  %s6 = ssub.s32 1, %s4
  %s7 = scalar_select 0, %s6, %s4
  $region1: #{project_forward.1} parent=0
    #allocation2 [shape = 'u8[4096]{0}', space=vmem, size = 0x1000, scoped, tag = 'input window, operand 1, single buffered']
    #allocation3 [shape = 's32[2]{0}', space=sflag, size = 0x8, scoped, tag = 'scoped memory for project_forward.1']
    #allocation4 [shape = 's32[2]{0}', space=sflag, size = 0x8, scoped, tag = 'scoped memory for project_forward.1']
    #allocation5 [shape = 'u8[1024]{0}', space=vmem, size = 0x400, scoped, tag = 'input window, operand 2, single buffered']
    #allocation6 [shape = 's32[1]{0}', space=sflag, size = 0x4, scoped, tag = 'scoped memory for project_forward.1']
    #allocation7 [shape = 'u8[2097152]{0}', space=vmem, size = 0x200000, scoped, tag = 'output window, operand 0']
    %8 = vsyncpa [#allocation3], 0
    %9 = vsyncpa [#allocation6], 0
    %10 = vsyncpa [#allocation4], 0
    %s11 = scalar_lea.sflag [#allocation4], 1
    %12 = vsyncpa %s11, 0
    loop: start=0, step=1, limit=6
    $region2: #{project_forward.1} parent=1 // loop_pre_header
      _
    $region3: #{project_forward.1} parent=1 // loop_header
      %s14 = sphi 0, %s18
      %p15 = scmp.ge.s32.totalorder %s14, 6
      %s21 = sphi 0, %s33
      %s22 = sphi 0, %s29
      %s23 = sphi 0, %s21
      %s24 = sphi 0, %s22
      %s25 = sphi 0, %s23
      %s26 = sphi 0, %s24
      %s38 = sphi 0, %s40
      %s41 = sphi 0, %s38
      %s42 = sphi 0, %s41
      %s58 = sphi 0, %s42
      %s62 = sphi 0, %s62
      %s64 = sphi 0, %s62
      %s65 = sphi 0, %s64
      %s79 = sphi 0, %s65
      %s83 = sphi 0, %s83
      %s85 = sphi 0, %s83
      %s86 = sphi 0, %s85
      %s100 = sphi 0, %s86
      %s108 = sphi 0, %s110
      %s111 = sphi 0, %s108
      %s112 = sphi 0, %s111
      %s128 = sphi 0, %s112
    $region4: #{project_forward.1} parent=1 // loop_header_branch
      %17 = sbr.rel (%p15) target = $region8
    $region5: #{project_forward.1} parent=1 // loop_body
      %s19 = ssub.s32 %s14, 1
      %s20 = ssub.s32 %s14, 2
      %s27 = sadd.s32 1, %s22
      %p28 = scmp.ge.s32.totalorder %s27, 1
      %s29 = scalar_select %p28, 0, %s27
      %s30 = sadd.s32 1, %s21
      %s31 = scalar_select %p28, %s30, %s21
      %p32 = scmp.ge.s32.totalorder %s31, 4
      %s33 = scalar_select %p32, 0, %s31
      %s34 = ssub.s32 %s21, %s33
      %s35 = ssub.s32 %s22, %s29
      %s36 = sor.u32 %s34, %s35
      %p37 = scmp.eq.s32.totalorder %s36, 0
      %s39 = sadd.s32 %s38, 1
      %s40 = scalar_select %p37, %s38, %s39
      %p43 = pneg %p37
      %p44 = scmp.eq.s32.totalorder %s14, 3
      %p45 = por %p43, %p44
      %p46 = scmp.ne.s32.totalorder %s38, %s41
      %p47 = scmp.eq.s32.totalorder %s14, 0
      %p48 = por %p46, %p47
      %p49 = scmp.ne.s32.totalorder %s38, %s41
      %p50 = scmp.eq.s32.totalorder %s19, 3
      %p51 = por %p49, %p50
      %p52 = scmp.ne.s32.totalorder %s41, %s42
      %p53 = scmp.eq.s32.totalorder %s19, 0
      %p54 = por %p52, %p53
      %p55 = scmp.ne.s32.totalorder %s41, %s42
      %p56 = scmp.eq.s32.totalorder %s20, 3
      %p57 = por %p55, %p56
      %p59 = scmp.ne.s32.totalorder %s42, %s58
      %p60 = scmp.eq.s32.totalorder %s20, 0
      %p61 = por %p59, %p60
      %s63 = sadd.s32 %s62, 1
      %p66 = scmp.eq.s32.totalorder %s14, 3
      %p67 = scmp.ne.s32.totalorder %s62, %s64
      %p68 = scmp.eq.s32.totalorder %s14, 0
      %p69 = por %p67, %p68
      %p70 = scmp.ne.s32.totalorder %s62, %s64
      %p71 = scmp.eq.s32.totalorder %s19, 3
      %p72 = por %p70, %p71
      %p73 = scmp.ne.s32.totalorder %s64, %s65
      %p74 = scmp.eq.s32.totalorder %s19, 0
      %p75 = por %p73, %p74
      %p76 = scmp.ne.s32.totalorder %s64, %s65
      %p77 = scmp.eq.s32.totalorder %s20, 3
      %p78 = por %p76, %p77
      %p80 = scmp.ne.s32.totalorder %s65, %s79
      %p81 = scmp.eq.s32.totalorder %s20, 0
      %p82 = por %p80, %p81
      %s84 = sadd.s32 %s83, 1
      %p87 = scmp.eq.s32.totalorder %s14, 3
      %p88 = scmp.ne.s32.totalorder %s83, %s85
      %p89 = scmp.eq.s32.totalorder %s14, 0
      %p90 = por %p88, %p89
      %p91 = scmp.ne.s32.totalorder %s83, %s85
      %p92 = scmp.eq.s32.totalorder %s19, 3
      %p93 = por %p91, %p92
      %p94 = scmp.ne.s32.totalorder %s85, %s86
      %p95 = scmp.eq.s32.totalorder %s19, 0
      %p96 = por %p94, %p95
      %p97 = scmp.ne.s32.totalorder %s85, %s86
      %p98 = scmp.eq.s32.totalorder %s20, 3
      %p99 = por %p97, %p98
      %p101 = scmp.ne.s32.totalorder %s86, %s100
      %p102 = scmp.eq.s32.totalorder %s20, 0
      %p103 = por %p101, %p102
      %s104 = ssub.s32 %s21, %s33
      %s105 = ssub.s32 %s22, %s29
      %s106 = sor.u32 %s104, %s105
      %p107 = scmp.eq.s32.totalorder %s106, 0
      %s109 = sadd.s32 %s108, 1
      %s110 = scalar_select %p107, %s108, %s109
      %p113 = pneg %p107
      %p114 = scmp.eq.s32.totalorder %s14, 3
      %p115 = por %p113, %p114
      %p116 = scmp.ne.s32.totalorder %s108, %s111
      %p117 = scmp.eq.s32.totalorder %s14, 0
      %p118 = por %p116, %p117
      %p119 = scmp.ne.s32.totalorder %s108, %s111
      %p120 = scmp.eq.s32.totalorder %s19, 3
      %p121 = por %p119, %p120
      %p122 = scmp.ne.s32.totalorder %s111, %s112
      %p123 = scmp.eq.s32.totalorder %s19, 0
      %p124 = por %p122, %p123
      %p125 = scmp.ne.s32.totalorder %s111, %s112
      %p126 = scmp.eq.s32.totalorder %s20, 3
      %p127 = por %p125, %p126
      %p129 = scmp.ne.s32.totalorder %s112, %s128
      %p130 = scmp.eq.s32.totalorder %s20, 0
      %p131 = por %p129, %p130
      %p132 = scmp.le.s32.totalorder 1, %s14
      %p133 = scmp.lt.s32.totalorder %s14, 5
      %p134 = pnand %p132, %p133
      %p135 = pneg %p134
      // Predicated region
      $region9: #{project_forward.1} parent=5 // pred_check
        _
      $region10: #{project_forward.1} parent=5 // pred_check_branch
        %137 = sbr.rel (%p134) target = $region12
      $region11: #{project_forward.1} parent=5 // pred_region
        %s138 = ssub.s32 %s14, 1
        // Predicated region
        $region13: #{project_forward.1} parent=11 // pred_check
          %p139 = pneg %p75
        $region14: #{project_forward.1} parent=11 // pred_check_branch
          %141 = sbr.rel (%p139) target = $region16
        $region15: #{project_forward.1} parent=11 // pred_region
          %s143 = ssub.s32 128, 128
          %144 = vsyncadd [#allocation3], %s143
          %s146 = sshll.u32 [#allocation2], 4
          %s147 = int_to_ptr.vmem [resolvable:$true] %s146
          %149 = dma.hbm_to_vmem [thread:$0]  %s1, 128, %s147, [#allocation3]
        $region16: #{project_forward.1} parent=11 // pred_fallthru
          _
        // Predicated region
        $region17: #{project_forward.1} parent=11 // pred_check
          %p150 = pneg %p96
        $region18: #{project_forward.1} parent=11 // pred_check_branch
          %152 = sbr.rel (%p150) target = $region20
        $region19: #{project_forward.1} parent=11 // pred_region
          %s154 = ssub.s32 32, 32
          %155 = vsyncadd [#allocation6], %s154
          %s157 = sshll.u32 [#allocation5], 4
          %s158 = int_to_ptr.vmem [resolvable:$true] %s157
          %160 = dma.hbm_to_vmem [thread:$0]  %s2, 32, %s158, [#allocation6]
        $region20: #{project_forward.1} parent=11 // pred_fallthru
          _
      $region12: #{project_forward.1} parent=5 // pred_fallthru
        _
      %p161 = scmp.lt.s32.totalorder %s14, 4
      // Predicated region
      $region21: #{project_forward.1} parent=5 // pred_check
        %p162 = pneg %p161
      $region22: #{project_forward.1} parent=5 // pred_check_branch
        %164 = sbr.rel (%p162) target = $region24
      $region23: #{project_forward.1} parent=5 // pred_region
        // Predicated region
        $region25: #{project_forward.1} parent=23 // pred_check
          %p165 = pneg %p48
        $region26: #{project_forward.1} parent=23 // pred_check_branch
          %167 = sbr.rel (%p165) target = $region28
        $region27: #{project_forward.1} parent=23 // pred_region
          %s168 = smul.u32 4, %s21
          %s169 = smul.u32 2, %s22
          %p170 = scmp.lt.s32.totalorder %s168, 15
          %s171 = scalar_select %p170, %s168, 15
          %p172 = scmp.lt.s32.totalorder %s169, 1
          %s173 = scalar_select %p172, %s169, 1
          %s174 = smul.addr %s171, 2
          %s175 = sadd.s32 %s173, %s174
          %s176 = smul.addr %s175, 4
          %s177 = scalar_lea.vmem %s0, %s176
          %s178 = smul.u32 4, %s21
          %s179 = smul.u32 2, %s22
        $region28: #{project_forward.1} parent=23 // pred_fallthru
          _
      $region24: #{project_forward.1} parent=5 // pred_fallthru
        _
      %p180 = scmp.le.s32.totalorder 1, %s14
      %p181 = scmp.lt.s32.totalorder %s14, 5
      %p182 = pnand %p180, %p181
      %p183 = pneg %p182
      // Predicated region
      $region29: #{project_forward.1} parent=5 // pred_check
        _
      $region30: #{project_forward.1} parent=5 // pred_check_branch
        %185 = sbr.rel (%p182) target = $region32
      $region31: #{project_forward.1} parent=5 // pred_region
        %s186 = ssub.s32 %s14, 1
        // Predicated region
        $region33: #{project_forward.1} parent=31 // pred_check
          %p187 = pneg %p75
        $region34: #{project_forward.1} parent=31 // pred_check_branch
          %189 = sbr.rel (%p187) target = $region36
        $region35: #{project_forward.1} parent=31 // pred_region
          %190 = dma.done [#allocation3], 128
        $region36: #{project_forward.1} parent=31 // pred_fallthru
          _
        // Predicated region
        $region37: #{project_forward.1} parent=31 // pred_check
          %p191 = pneg %p96
        $region38: #{project_forward.1} parent=31 // pred_check_branch
          %193 = sbr.rel (%p191) target = $region40
        $region39: #{project_forward.1} parent=31 // pred_region
          %194 = dma.done [#allocation6], 32
        $region40: #{project_forward.1} parent=31 // pred_fallthru
          _
        %s195 = smul.u32 4, %s23
        %s196 = smul.u32 2, %s24
        %p197 = scmp.lt.s32.totalorder %s195, 15
        %s198 = scalar_select %p197, %s195, 15
        %p199 = scmp.lt.s32.totalorder %s196, 1
        %s200 = scalar_select %p199, %s196, 1
        %s201 = smul.addr %s198, 2
        %s202 = sadd.s32 %s200, %s201
        %s203 = smul.addr %s202, 4
        %s204 = scalar_lea.vmem %s0, %s203
        %p205 = pneg %p54
        %p206 = pneg %p51
        %p207 = pneg %p75
        %p208 = pneg %p72
        %p209 = pneg %p96
        %p210 = pneg %p93
        %p211 = pneg %p124
        %p212 = pneg %p121
        %s213 = sand.u32 %s111, 1
        %s214 = scalar_lea.sflag [#allocation4], %s213
        %s215 = sand.u32 %s111, 1
        %s216 = smul.addr %s215, 2048
        %s217 = scalar_lea.vmem [#allocation7], %s216
        %s218 = smul.u32 4, %s23
        %s219 = smul.u32 2, %s24
        %p220 = scmp.lt.s32.totalorder %s218, 15
        %s221 = scalar_select %p220, %s218, 15
        %p222 = scmp.lt.s32.totalorder %s219, 1
        %s223 = scalar_select %p222, %s219, 1
        %s224 = smul.addr %s221, 2
        %s225 = sadd.s32 %s223, %s224
        %s226 = smul.addr %s225, 4
        %s227 = scalar_lea.vmem %s0, %s226
        %s228 = smul.u32 4, %s23
        %s229 = smul.u32 2, %s24
        %s230 = smul.u32 4, %s23
        %s231 = smul.u32 32, %s24
        %v232 = vld [vmem:[#allocation2] sm:$0xff]
        %v233 = vld [vmem:[#allocation5] sm:$0x3]
        %v234 = vld [vmem:[%s227] sm:$0xff]
        %v236 = vlaneseq
        %v237 = vshrl.u32 %v236, 7
        %v238 = vsub.s32 0, %v237
        %v239 = vrot.slane %v233, %v238
        %v240 = vlaneseq
        %v241 = vshrl.u32 %v240, 7
        %v242 = vsub.s32 1, %v241
        %v243 = vrot.slane %v233, %v242
        %v247 = vcombine.high %v234, %v234
        %249 = vxpose.xlu0.b32.start [1/16] %v234, 128
        %250 = vxpose.xlu0.b32.cont [2/16] 0.0, 128
        %251 = vxpose.xlu0.b32.cont [3/16] 0.0, 128
        %252 = vxpose.xlu0.b32.cont [4/16] 0.0, 128
        %253 = vxpose.xlu0.b32.cont [5/16] 0.0, 128
        %254 = vxpose.xlu0.b32.cont [6/16] 0.0, 128
        %255 = vxpose.xlu0.b32.cont [7/16] 0.0, 128
        %256 = vxpose.xlu0.b32.cont [8/16] 0.0, 128
        %257 = vxpose.xlu0.b32.cont [9/16] 0.0, 128
        %258 = vxpose.xlu0.b32.cont [10/16] 0.0, 128
        %259 = vxpose.xlu0.b32.cont [11/16] 0.0, 128
        %260 = vxpose.xlu0.b32.cont [12/16] 0.0, 128
        %261 = vxpose.xlu0.b32.cont [13/16] 0.0, 128
        %262 = vxpose.xlu0.b32.cont [14/16] 0.0, 128
        %263 = vxpose.xlu0.b32.cont [15/16] 0.0, 128
        %264 = vxpose.xlu0.b32.end [16/16] 0.0, 128
        %v265 = vpop.trf.xlu0
        %v266 = vpop.trf.xlu0
        %v267 = vpop.trf.xlu0
        %v268 = vpop.trf.xlu0
        %v269 = vpop.trf.xlu0
        %v270 = vpop.trf.xlu0
        %v271 = vpop.trf.xlu0
        %v272 = vpop.trf.xlu0
        %v273 = vpop.trf.xlu0
        %v274 = vpop.trf.xlu0
        %v275 = vpop.trf.xlu0
        %v276 = vpop.trf.xlu0
        %v277 = vpop.trf.xlu0
        %v278 = vpop.trf.xlu0
        %v279 = vpop.trf.xlu0
        %v280 = vpop.trf.xlu0
        %281 = vxpose.xlu0.b32.start [1/16] %v247, 128
        %282 = vxpose.xlu0.b32.cont [2/16] 0.0, 128
        %283 = vxpose.xlu0.b32.cont [3/16] 0.0, 128
        %284 = vxpose.xlu0.b32.cont [4/16] 0.0, 128
        %285 = vxpose.xlu0.b32.cont [5/16] 0.0, 128
        %286 = vxpose.xlu0.b32.cont [6/16] 0.0, 128
        %287 = vxpose.xlu0.b32.cont [7/16] 0.0, 128
        %288 = vxpose.xlu0.b32.cont [8/16] 0.0, 128
        %289 = vxpose.xlu0.b32.cont [9/16] 0.0, 128
        %290 = vxpose.xlu0.b32.cont [10/16] 0.0, 128
        %291 = vxpose.xlu0.b32.cont [11/16] 0.0, 128
        %292 = vxpose.xlu0.b32.cont [12/16] 0.0, 128
        %293 = vxpose.xlu0.b32.cont [13/16] 0.0, 128
        %294 = vxpose.xlu0.b32.cont [14/16] 0.0, 128
        %295 = vxpose.xlu0.b32.cont [15/16] 0.0, 128
        %296 = vxpose.xlu0.b32.end [16/16] 0.0, 128
        %v297 = vpop.trf.xlu0
        %v298 = vpop.trf.xlu0
        %v299 = vpop.trf.xlu0
        %v300 = vpop.trf.xlu0
        %v301 = vpop.trf.xlu0
        %v302 = vpop.trf.xlu0
        %v303 = vpop.trf.xlu0
        %v304 = vpop.trf.xlu0
        %v305 = vpop.trf.xlu0
        %v306 = vpop.trf.xlu0
        %v307 = vpop.trf.xlu0
        %v308 = vpop.trf.xlu0
        %v309 = vpop.trf.xlu0
        %v310 = vpop.trf.xlu0
        %v311 = vpop.trf.xlu0
        %v312 = vpop.trf.xlu0
        %v314 = vcombine.high %v232, %v232
        %vm315 = vcmask 31744
        %v317 = vsel %vm315, %v265, 0
        %v320 = vsel %vm315, %v266, 0
        %v323 = vsel %vm315, %v267, 0
        %v326 = vsel %vm315, %v268, 0
        %v329 = vsel %vm315, %v269, 0
        %v332 = vsel %vm315, %v270, 0
        %v335 = vsel %vm315, %v271, 0
        %v338 = vsel %vm315, %v272, 0
        %v341 = vsel %vm315, %v273, 0
        %v344 = vsel %vm315, %v274, 0
        %v347 = vsel %vm315, %v275, 0
        %v350 = vsel %vm315, %v276, 0
        %v353 = vsel %vm315, %v277, 0
        %v356 = vsel %vm315, %v278, 0
        %v359 = vsel %vm315, %v279, 0
        %v362 = vsel %vm315, %v280, 0
        %v365 = vsel %vm315, %v297, 0
        %v368 = vsel %vm315, %v298, 0
        %v371 = vsel %vm315, %v299, 0
        %v374 = vsel %vm315, %v300, 0
        %v377 = vsel %vm315, %v301, 0
        %v380 = vsel %vm315, %v302, 0
        %v383 = vsel %vm315, %v303, 0
        %v386 = vsel %vm315, %v304, 0
        %v389 = vsel %vm315, %v305, 0
        %v392 = vsel %vm315, %v306, 0
        %v395 = vsel %vm315, %v307, 0
        %v398 = vsel %vm315, %v308, 0
        %v401 = vsel %vm315, %v309, 0
        %v404 = vsel %vm315, %v310, 0
        %v407 = vsel %vm315, %v311, 0
        %v410 = vsel %vm315, %v312, 0
        %vm412 = vcmask 1043456
        %v413 = vsel %vm412, %v232, 0
        %v415 = vsel %vm412, %v314, 0
        %417 = vmatprep.subr.mxu0 %v415
        %418 = vmatpush1.msra.mxu0 %v413
        %419 = vmatprep.subr.mxu0 0.0
        %420 = vmatpush1.msra.mxu0 0.0
        %421 = vmatprep.subr.mxu0 0.0
        %422 = vmatpush1.msra.mxu0 0.0
        %423 = vmatprep.subr.mxu0 0.0
        %424 = vmatpush1.msra.mxu0 0.0
        %425 = vmatprep.subr.mxu0 0.0
        %426 = vmatpush1.msra.mxu0 0.0
        %427 = vmatprep.subr.mxu0 0.0
        %428 = vmatpush1.msra.mxu0 0.0
        %429 = vmatprep.subr.mxu0 0.0
        %430 = vmatpush1.msra.mxu0 0.0
        %431 = vmatprep.subr.mxu0 0.0
        %432 = vmatpush1.msra.mxu0 0.0
        %433 = vmatprep.subr.mxu0 0.0
        %434 = vmatpush1.msra.mxu0 0.0
        %435 = vmatprep.subr.mxu0 0.0
        %436 = vmatpush1.msra.mxu0 0.0
        %437 = vmatprep.subr.mxu0 0.0
        %438 = vmatpush1.msra.mxu0 0.0
        %439 = vmatprep.subr.mxu0 0.0
        %440 = vmatpush1.msra.mxu0 0.0
        %441 = vmatprep.subr.mxu0 0.0
        %442 = vmatpush1.msra.mxu0 0.0
        %443 = vmatprep.subr.mxu0 0.0
        %444 = vmatpush1.msra.mxu0 0.0
        %445 = vmatprep.subr.mxu0 0.0
        %446 = vmatpush1.msra.mxu0 0.0
        %447 = vmatprep.subr.mxu0 0.0
        %448 = vmatpush1.msra.mxu0 0.0
        %449 = vmatprep.subr.mxu0 0.0
        %450 = vmatpush1.msra.mxu0 0.0
        %451 = vmatprep.subr.mxu0 0.0
        %452 = vmatpush1.msra.mxu0 0.0
        %453 = vmatprep.subr.mxu0 0.0
        %454 = vmatpush1.msra.mxu0 0.0
        %455 = vmatprep.subr.mxu0 0.0
        %456 = vmatpush1.msra.mxu0 0.0
        %457 = vmatprep.subr.mxu0 0.0
        %458 = vmatpush1.msra.mxu0 0.0
        %459 = vmatprep.subr.mxu0 0.0
        %460 = vmatpush1.msra.mxu0 0.0
        %461 = vmatprep.subr.mxu0 0.0
        %462 = vmatpush1.msra.mxu0 0.0
        %463 = vmatprep.subr.mxu0 0.0
        %464 = vmatpush1.msra.mxu0 0.0
        %465 = vmatprep.subr.mxu0 0.0
        %466 = vmatpush1.msra.mxu0 0.0
        %467 = vmatprep.subr.mxu0 0.0
        %468 = vmatpush1.msra.mxu0 0.0
        %469 = vmatprep.subr.mxu0 0.0
        %470 = vmatpush1.msra.mxu0 0.0
        %471 = vmatprep.subr.mxu0 0.0
        %472 = vmatpush1.msra.mxu0 0.0
        %473 = vmatprep.subr.mxu0 0.0
        %474 = vmatpush1.msra.mxu0 0.0
        %475 = vmatprep.subr.mxu0 0.0
        %476 = vmatpush1.msra.mxu0 0.0
        %477 = vmatprep.subr.mxu0 0.0
        %478 = vmatpush1.msra.mxu0 0.0
        %479 = vmatprep.subr.mxu0 0.0
        %480 = vmatpush1.msra.mxu0 0.0
        %481 = vmatprep.mubr.f32.mxu0 0.0
        %482 = vmatmul.mubr.f32.gmra.mrb[0].mxu0 %v317
        %v483 = vpop.f32.mrb[0].mxu0
        %v484 = vadd.f32 %v239, %v483
        %v485 = vpop.f32.mrb[0].mxu0
        %v486 = vadd.f32 %v243, %v485
        %487 = vmatprep.mubr.f32.mxu0 0.0
        %488 = vmatmul.mubr.f32.gmra.mrb[0].mxu0 %v320
        %v489 = vpop.f32.mrb[0].mxu0
        %v490 = vadd.f32 %v239, %v489
        %v491 = vpop.f32.mrb[0].mxu0
        %v492 = vadd.f32 %v243, %v491
        %493 = vmatprep.mubr.f32.mxu0 0.0
        %494 = vmatmul.mubr.f32.gmra.mrb[0].mxu0 %v323
        %v495 = vpop.f32.mrb[0].mxu0
        %v496 = vadd.f32 %v239, %v495
        %v497 = vpop.f32.mrb[0].mxu0
        %v498 = vadd.f32 %v243, %v497
        %499 = vmatprep.mubr.f32.mxu0 0.0
        %500 = vmatmul.mubr.f32.gmra.mrb[0].mxu0 %v326
        %v501 = vpop.f32.mrb[0].mxu0
        %v502 = vadd.f32 %v239, %v501
        %v503 = vpop.f32.mrb[0].mxu0
        %v504 = vadd.f32 %v243, %v503
        %505 = vmatprep.mubr.f32.mxu0 0.0
        %506 = vmatmul.mubr.f32.gmra.mrb[0].mxu0 %v329
        %v507 = vpop.f32.mrb[0].mxu0
        %v508 = vadd.f32 %v239, %v507
        %v509 = vpop.f32.mrb[0].mxu0
        %v510 = vadd.f32 %v243, %v509
        %511 = vmatprep.mubr.f32.mxu0 0.0
        %512 = vmatmul.mubr.f32.gmra.mrb[0].mxu0 %v332
        %v513 = vpop.f32.mrb[0].mxu0
        %v514 = vadd.f32 %v239, %v513
        %v515 = vpop.f32.mrb[0].mxu0
        %v516 = vadd.f32 %v243, %v515
        %517 = vmatprep.mubr.f32.mxu0 0.0
        %518 = vmatmul.mubr.f32.gmra.mrb[0].mxu0 %v335
        %v519 = vpop.f32.mrb[0].mxu0
        %v520 = vadd.f32 %v239, %v519
        %v521 = vpop.f32.mrb[0].mxu0
        %v522 = vadd.f32 %v243, %v521
        %523 = vmatprep.mubr.f32.mxu0 0.0
        %524 = vmatmul.mubr.f32.gmra.mrb[0].mxu0 %v338
        %v525 = vpop.f32.mrb[0].mxu0
        %v526 = vadd.f32 %v239, %v525
        %v527 = vpop.f32.mrb[0].mxu0
        %v528 = vadd.f32 %v243, %v527
        %529 = vmatprep.mubr.f32.mxu0 0.0
        %530 = vmatmul.mubr.f32.gmra.mrb[0].mxu0 %v341
        %v531 = vpop.f32.mrb[0].mxu0
        %v532 = vadd.f32 %v239, %v531
        %v533 = vpop.f32.mrb[0].mxu0
        %v534 = vadd.f32 %v243, %v533
        %535 = vmatprep.mubr.f32.mxu0 0.0
        %536 = vmatmul.mubr.f32.gmra.mrb[0].mxu0 %v344
        %v537 = vpop.f32.mrb[0].mxu0
        %v538 = vadd.f32 %v239, %v537
        %v539 = vpop.f32.mrb[0].mxu0
        %v540 = vadd.f32 %v243, %v539
        %541 = vmatprep.mubr.f32.mxu0 0.0
        %542 = vmatmul.mubr.f32.gmra.mrb[0].mxu0 %v347
        %v543 = vpop.f32.mrb[0].mxu0
        %v544 = vadd.f32 %v239, %v543
        %v545 = vpop.f32.mrb[0].mxu0
        %v546 = vadd.f32 %v243, %v545
        %547 = vmatprep.mubr.f32.mxu0 0.0
        %548 = vmatmul.mubr.f32.gmra.mrb[0].mxu0 %v350
        %v549 = vpop.f32.mrb[0].mxu0
        %v550 = vadd.f32 %v239, %v549
        %v551 = vpop.f32.mrb[0].mxu0
        %v552 = vadd.f32 %v243, %v551
        %553 = vmatprep.mubr.f32.mxu0 0.0
        %554 = vmatmul.mubr.f32.gmra.mrb[0].mxu0 %v353
        %v555 = vpop.f32.mrb[0].mxu0
        %v556 = vadd.f32 %v239, %v555
        %v557 = vpop.f32.mrb[0].mxu0
        %v558 = vadd.f32 %v243, %v557
        %559 = vmatprep.mubr.f32.mxu0 0.0
        %560 = vmatmul.mubr.f32.gmra.mrb[0].mxu0 %v356
        %v561 = vpop.f32.mrb[0].mxu0
        %v562 = vadd.f32 %v239, %v561
        %v563 = vpop.f32.mrb[0].mxu0
        %v564 = vadd.f32 %v243, %v563
        %565 = vmatprep.mubr.f32.mxu0 0.0
        %566 = vmatmul.mubr.f32.gmra.mrb[0].mxu0 %v359
        %v567 = vpop.f32.mrb[0].mxu0
        %v568 = vadd.f32 %v239, %v567
        %v569 = vpop.f32.mrb[0].mxu0
        %v570 = vadd.f32 %v243, %v569
        %571 = vmatprep.mubr.f32.mxu0 0.0
        %572 = vmatmul.mubr.f32.gmra.mrb[0].mxu0 %v362
        %v573 = vpop.f32.mrb[0].mxu0
        %v574 = vadd.f32 %v239, %v573
        %v575 = vpop.f32.mrb[0].mxu0
        %v576 = vadd.f32 %v243, %v575
        %577 = vmatprep.mubr.f32.mxu0 0.0
        %578 = vmatmul.mubr.f32.gmra.mrb[0].mxu0 %v365
        %v579 = vpop.f32.mrb[0].mxu0
        %v580 = vadd.f32 %v239, %v579
        %v581 = vpop.f32.mrb[0].mxu0
        %v582 = vadd.f32 %v243, %v581
        %583 = vmatprep.mubr.f32.mxu0 0.0
        %584 = vmatmul.mubr.f32.gmra.mrb[0].mxu0 %v368
        %v585 = vpop.f32.mrb[0].mxu0
        %v586 = vadd.f32 %v239, %v585
        %v587 = vpop.f32.mrb[0].mxu0
        %v588 = vadd.f32 %v243, %v587
        %589 = vmatprep.mubr.f32.mxu0 0.0
        %590 = vmatmul.mubr.f32.gmra.mrb[0].mxu0 %v371
        %v591 = vpop.f32.mrb[0].mxu0
        %v592 = vadd.f32 %v239, %v591
        %v593 = vpop.f32.mrb[0].mxu0
        %v594 = vadd.f32 %v243, %v593
        %595 = vmatprep.mubr.f32.mxu0 0.0
        %596 = vmatmul.mubr.f32.gmra.mrb[0].mxu0 %v374
        %v597 = vpop.f32.mrb[0].mxu0
        %v598 = vadd.f32 %v239, %v597
        %v599 = vpop.f32.mrb[0].mxu0
        %v600 = vadd.f32 %v243, %v599
        %601 = vmatprep.mubr.f32.mxu0 0.0
        %602 = vmatmul.mubr.f32.gmra.mrb[0].mxu0 %v377
        %v603 = vpop.f32.mrb[0].mxu0
        %v604 = vadd.f32 %v239, %v603
        %v605 = vpop.f32.mrb[0].mxu0
        %v606 = vadd.f32 %v243, %v605
        %607 = vmatprep.mubr.f32.mxu0 0.0
        %608 = vmatmul.mubr.f32.gmra.mrb[0].mxu0 %v380
        %v609 = vpop.f32.mrb[0].mxu0
        %v610 = vadd.f32 %v239, %v609
        %v611 = vpop.f32.mrb[0].mxu0
        %v612 = vadd.f32 %v243, %v611
        %613 = vmatprep.mubr.f32.mxu0 0.0
        %614 = vmatmul.mubr.f32.gmra.mrb[0].mxu0 %v383
        %v615 = vpop.f32.mrb[0].mxu0
        %v616 = vadd.f32 %v239, %v615
        %v617 = vpop.f32.mrb[0].mxu0
        %v618 = vadd.f32 %v243, %v617
        %619 = vmatprep.mubr.f32.mxu0 0.0
        %620 = vmatmul.mubr.f32.gmra.mrb[0].mxu0 %v386
        %v621 = vpop.f32.mrb[0].mxu0
        %v622 = vadd.f32 %v239, %v621
        %v623 = vpop.f32.mrb[0].mxu0
        %v624 = vadd.f32 %v243, %v623
        %625 = vmatprep.mubr.f32.mxu0 0.0
        %626 = vmatmul.mubr.f32.gmra.mrb[0].mxu0 %v389
        %v627 = vpop.f32.mrb[0].mxu0
        %v628 = vadd.f32 %v239, %v627
        %v629 = vpop.f32.mrb[0].mxu0
        %v630 = vadd.f32 %v243, %v629
        %631 = vmatprep.mubr.f32.mxu0 0.0
        %632 = vmatmul.mubr.f32.gmra.mrb[0].mxu0 %v392
        %v633 = vpop.f32.mrb[0].mxu0
        %v634 = vadd.f32 %v239, %v633
        %v635 = vpop.f32.mrb[0].mxu0
        %v636 = vadd.f32 %v243, %v635
        %637 = vmatprep.mubr.f32.mxu0 0.0
        %638 = vmatmul.mubr.f32.gmra.mrb[0].mxu0 %v395
        %v639 = vpop.f32.mrb[0].mxu0
        %v640 = vadd.f32 %v239, %v639
        %v641 = vpop.f32.mrb[0].mxu0
        %v642 = vadd.f32 %v243, %v641
        %643 = vmatprep.mubr.f32.mxu0 0.0
        %644 = vmatmul.mubr.f32.gmra.mrb[0].mxu0 %v398
        %v645 = vpop.f32.mrb[0].mxu0
        %v646 = vadd.f32 %v239, %v645
        %v647 = vpop.f32.mrb[0].mxu0
        %v648 = vadd.f32 %v243, %v647
        %649 = vmatprep.mubr.f32.mxu0 0.0
        %650 = vmatmul.mubr.f32.gmra.mrb[0].mxu0 %v401
        %v651 = vpop.f32.mrb[0].mxu0
        %v652 = vadd.f32 %v239, %v651
        %v653 = vpop.f32.mrb[0].mxu0
        %v654 = vadd.f32 %v243, %v653
        %655 = vmatprep.mubr.f32.mxu0 0.0
        %656 = vmatmul.mubr.f32.gmra.mrb[0].mxu0 %v404
        %v657 = vpop.f32.mrb[0].mxu0
        %v658 = vadd.f32 %v239, %v657
        %v659 = vpop.f32.mrb[0].mxu0
        %v660 = vadd.f32 %v243, %v659
        %661 = vmatprep.mubr.f32.mxu0 0.0
        %662 = vmatmul.mubr.f32.gmra.mrb[0].mxu0 %v407
        %v663 = vpop.f32.mrb[0].mxu0
        %v664 = vadd.f32 %v239, %v663
        %v665 = vpop.f32.mrb[0].mxu0
        %v666 = vadd.f32 %v243, %v665
        %667 = vmatprep.mubr.f32.mxu0 0.0
        %668 = vmatmul.mubr.f32.gmra.mrb[0].mxu0 %v410
        %v669 = vpop.f32.mrb[0].mxu0
        %v670 = vadd.f32 %v239, %v669
        %v671 = vpop.f32.mrb[0].mxu0
        %v672 = vadd.f32 %v243, %v671
        %673 = vdwg.mxu0
        %674 = vst [vmem:[%s217] sm:$0xff] %v484
        %675 = vst [vmem:[%s217 + $0x8] sm:$0xff] %v486
        %676 = vst [vmem:[%s217 + $0x10] sm:$0xff] %v490
        %677 = vst [vmem:[%s217 + $0x18] sm:$0xff] %v492
        %678 = vst [vmem:[%s217 + $0x20] sm:$0xff] %v496
        %679 = vst [vmem:[%s217 + $0x28] sm:$0xff] %v498
        %680 = vst [vmem:[%s217 + $0x30] sm:$0xff] %v502
        %681 = vst [vmem:[%s217 + $0x38] sm:$0xff] %v504
        %682 = vst [vmem:[%s217 + $0x40] sm:$0xff] %v508
        %683 = vst [vmem:[%s217 + $0x48] sm:$0xff] %v510
        %684 = vst [vmem:[%s217 + $0x50] sm:$0xff] %v514
        %685 = vst [vmem:[%s217 + $0x58] sm:$0xff] %v516
        %686 = vst [vmem:[%s217 + $0x60] sm:$0xff] %v520
        %687 = vst [vmem:[%s217 + $0x68] sm:$0xff] %v522
        %688 = vst [vmem:[%s217 + $0x70] sm:$0xff] %v526
        %689 = vst [vmem:[%s217 + $0x78] sm:$0xff] %v528
        %690 = vst [vmem:[%s217 + $0x80] sm:$0xff] %v532
        %691 = vst [vmem:[%s217 + $0x88] sm:$0xff] %v534
        %692 = vst [vmem:[%s217 + $0x90] sm:$0xff] %v538
        %693 = vst [vmem:[%s217 + $0x98] sm:$0xff] %v540
        %694 = vst [vmem:[%s217 + $0xa0] sm:$0xff] %v544
        %695 = vst [vmem:[%s217 + $0xa8] sm:$0xff] %v546
        %696 = vst [vmem:[%s217 + $0xb0] sm:$0xff] %v550
        %697 = vst [vmem:[%s217 + $0xb8] sm:$0xff] %v552
        %698 = vst [vmem:[%s217 + $0xc0] sm:$0xff] %v556
        %699 = vst [vmem:[%s217 + $0xc8] sm:$0xff] %v558
        %700 = vst [vmem:[%s217 + $0xd0] sm:$0xff] %v562
        %701 = vst [vmem:[%s217 + $0xd8] sm:$0xff] %v564
        %702 = vst [vmem:[%s217 + $0xe0] sm:$0xff] %v568
        %703 = vst [vmem:[%s217 + $0xe8] sm:$0xff] %v570
        %704 = vst [vmem:[%s217 + $0xf0] sm:$0xff] %v574
        %705 = vst [vmem:[%s217 + $0xf8] sm:$0xff] %v576
        %706 = vst [vmem:[%s217 + $0x100] sm:$0xff] %v580
        %707 = vst [vmem:[%s217 + $0x108] sm:$0xff] %v582
        %708 = vst [vmem:[%s217 + $0x110] sm:$0xff] %v586
        %709 = vst [vmem:[%s217 + $0x118] sm:$0xff] %v588
        %710 = vst [vmem:[%s217 + $0x120] sm:$0xff] %v592
        %711 = vst [vmem:[%s217 + $0x128] sm:$0xff] %v594
        %712 = vst [vmem:[%s217 + $0x130] sm:$0xff] %v598
        %713 = vst [vmem:[%s217 + $0x138] sm:$0xff] %v600
        %714 = vst [vmem:[%s217 + $0x140] sm:$0xff] %v604
        %715 = vst [vmem:[%s217 + $0x148] sm:$0xff] %v606
        %716 = vst [vmem:[%s217 + $0x150] sm:$0xff] %v610
        %717 = vst [vmem:[%s217 + $0x158] sm:$0xff] %v612
        %718 = vst [vmem:[%s217 + $0x160] sm:$0xff] %v616
        %719 = vst [vmem:[%s217 + $0x168] sm:$0xff] %v618
        %720 = vst [vmem:[%s217 + $0x170] sm:$0xff] %v622
        %721 = vst [vmem:[%s217 + $0x178] sm:$0xff] %v624
        %722 = vst [vmem:[%s217 + $0x180] sm:$0xff] %v628
        %723 = vst [vmem:[%s217 + $0x188] sm:$0xff] %v630
        %724 = vst [vmem:[%s217 + $0x190] sm:$0xff] %v634
        %725 = vst [vmem:[%s217 + $0x198] sm:$0xff] %v636
        %726 = vst [vmem:[%s217 + $0x1a0] sm:$0xff] %v640
        %727 = vst [vmem:[%s217 + $0x1a8] sm:$0xff] %v642
        %728 = vst [vmem:[%s217 + $0x1b0] sm:$0xff] %v646
        %729 = vst [vmem:[%s217 + $0x1b8] sm:$0xff] %v648
        %730 = vst [vmem:[%s217 + $0x1c0] sm:$0xff] %v652
        %731 = vst [vmem:[%s217 + $0x1c8] sm:$0xff] %v654
        %732 = vst [vmem:[%s217 + $0x1d0] sm:$0xff] %v658
        %733 = vst [vmem:[%s217 + $0x1d8] sm:$0xff] %v660
        %734 = vst [vmem:[%s217 + $0x1e0] sm:$0xff] %v664
        %735 = vst [vmem:[%s217 + $0x1e8] sm:$0xff] %v666
        %736 = vst [vmem:[%s217 + $0x1f0] sm:$0xff] %v670
        %737 = vst [vmem:[%s217 + $0x1f8] sm:$0xff] %v672
        %s738 = scalar_lea.vmem %s227, 8
        %v739 = vld [vmem:[%s738] sm:$0xff]
        %v741 = vcombine.high %v739, %v739
        %743 = vxpose.xlu0.b32.start [1/16] %v739, 128
        %744 = vxpose.xlu0.b32.cont [2/16] 0.0, 128
        %745 = vxpose.xlu0.b32.cont [3/16] 0.0, 128
        %746 = vxpose.xlu0.b32.cont [4/16] 0.0, 128
        %747 = vxpose.xlu0.b32.cont [5/16] 0.0, 128
        %748 = vxpose.xlu0.b32.cont [6/16] 0.0, 128
        %749 = vxpose.xlu0.b32.cont [7/16] 0.0, 128
        %750 = vxpose.xlu0.b32.cont [8/16] 0.0, 128
        %751 = vxpose.xlu0.b32.cont [9/16] 0.0, 128
        %752 = vxpose.xlu0.b32.cont [10/16] 0.0, 128
        %753 = vxpose.xlu0.b32.cont [11/16] 0.0, 128
        %754 = vxpose.xlu0.b32.cont [12/16] 0.0, 128
        %755 = vxpose.xlu0.b32.cont [13/16] 0.0, 128
        %756 = vxpose.xlu0.b32.cont [14/16] 0.0, 128
        %757 = vxpose.xlu0.b32.cont [15/16] 0.0, 128
        %758 = vxpose.xlu0.b32.end [16/16] 0.0, 128
        %v759 = vpop.trf.xlu0
        %v760 = vpop.trf.xlu0
        %v761 = vpop.trf.xlu0
        %v762 = vpop.trf.xlu0
        %v763 = vpop.trf.xlu0
        %v764 = vpop.trf.xlu0
        %v765 = vpop.trf.xlu0
        %v766 = vpop.trf.xlu0
        %v767 = vpop.trf.xlu0
        %v768 = vpop.trf.xlu0
        %v769 = vpop.trf.xlu0
        %v770 = vpop.trf.xlu0
        %v771 = vpop.trf.xlu0
        %v772 = vpop.trf.xlu0
        %v773 = vpop.trf.xlu0
        %v774 = vpop.trf.xlu0
        %775 = vxpose.xlu0.b32.start [1/16] %v741, 128
        %776 = vxpose.xlu0.b32.cont [2/16] 0.0, 128
        %777 = vxpose.xlu0.b32.cont [3/16] 0.0, 128
        %778 = vxpose.xlu0.b32.cont [4/16] 0.0, 128
        %779 = vxpose.xlu0.b32.cont [5/16] 0.0, 128
        %780 = vxpose.xlu0.b32.cont [6/16] 0.0, 128
        %781 = vxpose.xlu0.b32.cont [7/16] 0.0, 128
        %782 = vxpose.xlu0.b32.cont [8/16] 0.0, 128
        %783 = vxpose.xlu0.b32.cont [9/16] 0.0, 128
        %784 = vxpose.xlu0.b32.cont [10/16] 0.0, 128
        %785 = vxpose.xlu0.b32.cont [11/16] 0.0, 128
        %786 = vxpose.xlu0.b32.cont [12/16] 0.0, 128
        %787 = vxpose.xlu0.b32.cont [13/16] 0.0, 128
        %788 = vxpose.xlu0.b32.cont [14/16] 0.0, 128
        %789 = vxpose.xlu0.b32.cont [15/16] 0.0, 128
        %790 = vxpose.xlu0.b32.end [16/16] 0.0, 128
        %v791 = vpop.trf.xlu0
        %v792 = vpop.trf.xlu0
        %v793 = vpop.trf.xlu0
        %v794 = vpop.trf.xlu0
        %v795 = vpop.trf.xlu0
        %v796 = vpop.trf.xlu0
        %v797 = vpop.trf.xlu0
        %v798 = vpop.trf.xlu0
        %v799 = vpop.trf.xlu0
        %v800 = vpop.trf.xlu0
        %v801 = vpop.trf.xlu0
        %v802 = vpop.trf.xlu0
        %v803 = vpop.trf.xlu0
        %v804 = vpop.trf.xlu0
        %v805 = vpop.trf.xlu0
        %v806 = vpop.trf.xlu0
        %v808 = vsel %vm315, %v759, 0
        %v811 = vsel %vm315, %v760, 0
        %v814 = vsel %vm315, %v761, 0
        %v817 = vsel %vm315, %v762, 0
        %v820 = vsel %vm315, %v763, 0
        %v823 = vsel %vm315, %v764, 0
        %v826 = vsel %vm315, %v765, 0
        %v829 = vsel %vm315, %v766, 0
        %v832 = vsel %vm315, %v767, 0
        %v835 = vsel %vm315, %v768, 0
        %v838 = vsel %vm315, %v769, 0
        %v841 = vsel %vm315, %v770, 0
        %v844 = vsel %vm315, %v771, 0
        %v847 = vsel %vm315, %v772, 0
        %v850 = vsel %vm315, %v773, 0
        %v853 = vsel %vm315, %v774, 0
        %v856 = vsel %vm315, %v791, 0
        %v859 = vsel %vm315, %v792, 0
        %v862 = vsel %vm315, %v793, 0
        %v865 = vsel %vm315, %v794, 0
        %v868 = vsel %vm315, %v795, 0
        %v871 = vsel %vm315, %v796, 0
        %v874 = vsel %vm315, %v797, 0
        %v877 = vsel %vm315, %v798, 0
        %v880 = vsel %vm315, %v799, 0
        %v883 = vsel %vm315, %v800, 0
        %v886 = vsel %vm315, %v801, 0
        %v889 = vsel %vm315, %v802, 0
        %v892 = vsel %vm315, %v803, 0
        %v895 = vsel %vm315, %v804, 0
        %v898 = vsel %vm315, %v805, 0
        %v901 = vsel %vm315, %v806, 0
        %903 = vmatprep.subr.mxu0 %v415
        %904 = vmatpush1.msra.mxu0 %v413
        %905 = vmatprep.subr.mxu0 0.0
        %906 = vmatpush1.msra.mxu0 0.0
        %907 = vmatprep.subr.mxu0 0.0
        %908 = vmatpush1.msra.mxu0 0.0
        %909 = vmatprep.subr.mxu0 0.0
        %910 = vmatpush1.msra.mxu0 0.0
        %911 = vmatprep.subr.mxu0 0.0
        %912 = vmatpush1.msra.mxu0 0.0
        %913 = vmatprep.subr.mxu0 0.0
        %914 = vmatpush1.msra.mxu0 0.0
        %915 = vmatprep.subr.mxu0 0.0
        %916 = vmatpush1.msra.mxu0 0.0
        %917 = vmatprep.subr.mxu0 0.0
        %918 = vmatpush1.msra.mxu0 0.0
        %919 = vmatprep.subr.mxu0 0.0
        %920 = vmatpush1.msra.mxu0 0.0
        %921 = vmatprep.subr.mxu0 0.0
        %922 = vmatpush1.msra.mxu0 0.0
        %923 = vmatprep.subr.mxu0 0.0
        %924 = vmatpush1.msra.mxu0 0.0
        %925 = vmatprep.subr.mxu0 0.0
        %926 = vmatpush1.msra.mxu0 0.0
        %927 = vmatprep.subr.mxu0 0.0
        %928 = vmatpush1.msra.mxu0 0.0
        %929 = vmatprep.subr.mxu0 0.0
        %930 = vmatpush1.msra.mxu0 0.0
        %931 = vmatprep.subr.mxu0 0.0
        %932 = vmatpush1.msra.mxu0 0.0
        %933 = vmatprep.subr.mxu0 0.0
        %934 = vmatpush1.msra.mxu0 0.0
        %935 = vmatprep.subr.mxu0 0.0
        %936 = vmatpush1.msra.mxu0 0.0
        %937 = vmatprep.subr.mxu0 0.0
        %938 = vmatpush1.msra.mxu0 0.0
        %939 = vmatprep.subr.mxu0 0.0
        %940 = vmatpush1.msra.mxu0 0.0
        %941 = vmatprep.subr.mxu0 0.0
        %942 = vmatpush1.msra.mxu0 0.0
        %943 = vmatprep.subr.mxu0 0.0
        %944 = vmatpush1.msra.mxu0 0.0
        %945 = vmatprep.subr.mxu0 0.0
        %946 = vmatpush1.msra.mxu0 0.0
        %947 = vmatprep.subr.mxu0 0.0
        %948 = vmatpush1.msra.mxu0 0.0
        %949 = vmatprep.subr.mxu0 0.0
        %950 = vmatpush1.msra.mxu0 0.0
        %951 = vmatprep.subr.mxu0 0.0
        %952 = vmatpush1.msra.mxu0 0.0
        %953 = vmatprep.subr.mxu0 0.0
        %954 = vmatpush1.msra.mxu0 0.0
        %955 = vmatprep.subr.mxu0 0.0
        %956 = vmatpush1.msra.mxu0 0.0
        %957 = vmatprep.subr.mxu0 0.0
        %958 = vmatpush1.msra.mxu0 0.0
        %959 = vmatprep.subr.mxu0 0.0
        %960 = vmatpush1.msra.mxu0 0.0
        %961 = vmatprep.subr.mxu0 0.0
        %962 = vmatpush1.msra.mxu0 0.0
        %963 = vmatprep.subr.mxu0 0.0
        %964 = vmatpush1.msra.mxu0 0.0
        %965 = vmatprep.subr.mxu0 0.0
        %966 = vmatpush1.msra.mxu0 0.0
        %967 = vmatprep.mubr.f32.mxu0 0.0
        %968 = vmatmul.mubr.f32.gmra.mrb[0].mxu0 %v808
        %v969 = vpop.f32.mrb[0].mxu0
        %v970 = vadd.f32 %v239, %v969
        %v971 = vpop.f32.mrb[0].mxu0
        %v972 = vadd.f32 %v243, %v971
        %973 = vmatprep.mubr.f32.mxu0 0.0
        %974 = vmatmul.mubr.f32.gmra.mrb[0].mxu0 %v811
        %v975 = vpop.f32.mrb[0].mxu0
        %v976 = vadd.f32 %v239, %v975
        %v977 = vpop.f32.mrb[0].mxu0
        %v978 = vadd.f32 %v243, %v977
        %979 = vmatprep.mubr.f32.mxu0 0.0
        %980 = vmatmul.mubr.f32.gmra.mrb[0].mxu0 %v814
        %v981 = vpop.f32.mrb[0].mxu0
        %v982 = vadd.f32 %v239, %v981
        %v983 = vpop.f32.mrb[0].mxu0
        %v984 = vadd.f32 %v243, %v983
        %985 = vmatprep.mubr.f32.mxu0 0.0
        %986 = vmatmul.mubr.f32.gmra.mrb[0].mxu0 %v817
        %v987 = vpop.f32.mrb[0].mxu0
        %v988 = vadd.f32 %v239, %v987
        %v989 = vpop.f32.mrb[0].mxu0
        %v990 = vadd.f32 %v243, %v989
        %991 = vmatprep.mubr.f32.mxu0 0.0
        %992 = vmatmul.mubr.f32.gmra.mrb[0].mxu0 %v820
        %v993 = vpop.f32.mrb[0].mxu0
        %v994 = vadd.f32 %v239, %v993
        %v995 = vpop.f32.mrb[0].mxu0
        %v996 = vadd.f32 %v243, %v995
        %997 = vmatprep.mubr.f32.mxu0 0.0
        %998 = vmatmul.mubr.f32.gmra.mrb[0].mxu0 %v823
        %v999 = vpop.f32.mrb[0].mxu0
        %v1000 = vadd.f32 %v239, %v999
        %v1001 = vpop.f32.mrb[0].mxu0
        %v1002 = vadd.f32 %v243, %v1001
        %1003 = vmatprep.mubr.f32.mxu0 0.0
        %1004 = vmatmul.mubr.f32.gmra.mrb[0].mxu0 %v826
        %v1005 = vpop.f32.mrb[0].mxu0
        %v1006 = vadd.f32 %v239, %v1005
        %v1007 = vpop.f32.mrb[0].mxu0
        %v1008 = vadd.f32 %v243, %v1007
        %1009 = vmatprep.mubr.f32.mxu0 0.0
        %1010 = vmatmul.mubr.f32.gmra.mrb[0].mxu0 %v829
        %v1011 = vpop.f32.mrb[0].mxu0
        %v1012 = vadd.f32 %v239, %v1011
        %v1013 = vpop.f32.mrb[0].mxu0
        %v1014 = vadd.f32 %v243, %v1013
        %1015 = vmatprep.mubr.f32.mxu0 0.0
        %1016 = vmatmul.mubr.f32.gmra.mrb[0].mxu0 %v832
        %v1017 = vpop.f32.mrb[0].mxu0
        %v1018 = vadd.f32 %v239, %v1017
        %v1019 = vpop.f32.mrb[0].mxu0
        %v1020 = vadd.f32 %v243, %v1019
        %1021 = vmatprep.mubr.f32.mxu0 0.0
        %1022 = vmatmul.mubr.f32.gmra.mrb[0].mxu0 %v835
        %v1023 = vpop.f32.mrb[0].mxu0
        %v1024 = vadd.f32 %v239, %v1023
        %v1025 = vpop.f32.mrb[0].mxu0
        %v1026 = vadd.f32 %v243, %v1025
        %1027 = vmatprep.mubr.f32.mxu0 0.0
        %1028 = vmatmul.mubr.f32.gmra.mrb[0].mxu0 %v838
        %v1029 = vpop.f32.mrb[0].mxu0
        %v1030 = vadd.f32 %v239, %v1029
        %v1031 = vpop.f32.mrb[0].mxu0
        %v1032 = vadd.f32 %v243, %v1031
        %1033 = vmatprep.mubr.f32.mxu0 0.0
        %1034 = vmatmul.mubr.f32.gmra.mrb[0].mxu0 %v841
        %v1035 = vpop.f32.mrb[0].mxu0
        %v1036 = vadd.f32 %v239, %v1035
        %v1037 = vpop.f32.mrb[0].mxu0
        %v1038 = vadd.f32 %v243, %v1037
        %1039 = vmatprep.mubr.f32.mxu0 0.0
        %1040 = vmatmul.mubr.f32.gmra.mrb[0].mxu0 %v844
        %v1041 = vpop.f32.mrb[0].mxu0
        %v1042 = vadd.f32 %v239, %v1041
        %v1043 = vpop.f32.mrb[0].mxu0
        %v1044 = vadd.f32 %v243, %v1043
        %1045 = vmatprep.mubr.f32.mxu0 0.0
        %1046 = vmatmul.mubr.f32.gmra.mrb[0].mxu0 %v847
        %v1047 = vpop.f32.mrb[0].mxu0
        %v1048 = vadd.f32 %v239, %v1047
        %v1049 = vpop.f32.mrb[0].mxu0
        %v1050 = vadd.f32 %v243, %v1049
        %1051 = vmatprep.mubr.f32.mxu0 0.0
        %1052 = vmatmul.mubr.f32.gmra.mrb[0].mxu0 %v850
        %v1053 = vpop.f32.mrb[0].mxu0
        %v1054 = vadd.f32 %v239, %v1053
        %v1055 = vpop.f32.mrb[0].mxu0
        %v1056 = vadd.f32 %v243, %v1055
        %1057 = vmatprep.mubr.f32.mxu0 0.0
        %1058 = vmatmul.mubr.f32.gmra.mrb[0].mxu0 %v853
        %v1059 = vpop.f32.mrb[0].mxu0
        %v1060 = vadd.f32 %v239, %v1059
        %v1061 = vpop.f32.mrb[0].mxu0
        %v1062 = vadd.f32 %v243, %v1061
        %1063 = vmatprep.mubr.f32.mxu0 0.0
        %1064 = vmatmul.mubr.f32.gmra.mrb[0].mxu0 %v856
        %v1065 = vpop.f32.mrb[0].mxu0
        %v1066 = vadd.f32 %v239, %v1065
        %v1067 = vpop.f32.mrb[0].mxu0
        %v1068 = vadd.f32 %v243, %v1067
        %1069 = vmatprep.mubr.f32.mxu0 0.0
        %1070 = vmatmul.mubr.f32.gmra.mrb[0].mxu0 %v859
        %v1071 = vpop.f32.mrb[0].mxu0
        %v1072 = vadd.f32 %v239, %v1071
        %v1073 = vpop.f32.mrb[0].mxu0
        %v1074 = vadd.f32 %v243, %v1073
        %1075 = vmatprep.mubr.f32.mxu0 0.0
        %1076 = vmatmul.mubr.f32.gmra.mrb[0].mxu0 %v862
        %v1077 = vpop.f32.mrb[0].mxu0
        %v1078 = vadd.f32 %v239, %v1077
        %v1079 = vpop.f32.mrb[0].mxu0
        %v1080 = vadd.f32 %v243, %v1079
        %1081 = vmatprep.mubr.f32.mxu0 0.0
        %1082 = vmatmul.mubr.f32.gmra.mrb[0].mxu0 %v865
        %v1083 = vpop.f32.mrb[0].mxu0
        %v1084 = vadd.f32 %v239, %v1083
        %v1085 = vpop.f32.mrb[0].mxu0
        %v1086 = vadd.f32 %v243, %v1085
        %1087 = vmatprep.mubr.f32.mxu0 0.0
        %1088 = vmatmul.mubr.f32.gmra.mrb[0].mxu0 %v868
        %v1089 = vpop.f32.mrb[0].mxu0
        %v1090 = vadd.f32 %v239, %v1089
        %v1091 = vpop.f32.mrb[0].mxu0
        %v1092 = vadd.f32 %v243, %v1091
        %1093 = vmatprep.mubr.f32.mxu0 0.0
        %1094 = vmatmul.mubr.f32.gmra.mrb[0].mxu0 %v871
        %v1095 = vpop.f32.mrb[0].mxu0
        %v1096 = vadd.f32 %v239, %v1095
        %v1097 = vpop.f32.mrb[0].mxu0
        %v1098 = vadd.f32 %v243, %v1097
        %1099 = vmatprep.mubr.f32.mxu0 0.0
        %1100 = vmatmul.mubr.f32.gmra.mrb[0].mxu0 %v874
        %v1101 = vpop.f32.mrb[0].mxu0
        %v1102 = vadd.f32 %v239, %v1101
        %v1103 = vpop.f32.mrb[0].mxu0
        %v1104 = vadd.f32 %v243, %v1103
        %1105 = vmatprep.mubr.f32.mxu0 0.0
        %1106 = vmatmul.mubr.f32.gmra.mrb[0].mxu0 %v877
        %v1107 = vpop.f32.mrb[0].mxu0
        %v1108 = vadd.f32 %v239, %v1107
        %v1109 = vpop.f32.mrb[0].mxu0
        %v1110 = vadd.f32 %v243, %v1109
        %1111 = vmatprep.mubr.f32.mxu0 0.0
        %1112 = vmatmul.mubr.f32.gmra.mrb[0].mxu0 %v880
        %v1113 = vpop.f32.mrb[0].mxu0
        %v1114 = vadd.f32 %v239, %v1113
        %v1115 = vpop.f32.mrb[0].mxu0
        %v1116 = vadd.f32 %v243, %v1115
        %1117 = vmatprep.mubr.f32.mxu0 0.0
        %1118 = vmatmul.mubr.f32.gmra.mrb[0].mxu0 %v883
        %v1119 = vpop.f32.mrb[0].mxu0
        %v1120 = vadd.f32 %v239, %v1119
        %v1121 = vpop.f32.mrb[0].mxu0
        %v1122 = vadd.f32 %v243, %v1121
        %1123 = vmatprep.mubr.f32.mxu0 0.0
        %1124 = vmatmul.mubr.f32.gmra.mrb[0].mxu0 %v886
        %v1125 = vpop.f32.mrb[0].mxu0
        %v1126 = vadd.f32 %v239, %v1125
        %v1127 = vpop.f32.mrb[0].mxu0
        %v1128 = vadd.f32 %v243, %v1127
        %1129 = vmatprep.mubr.f32.mxu0 0.0
        %1130 = vmatmul.mubr.f32.gmra.mrb[0].mxu0 %v889
        %v1131 = vpop.f32.mrb[0].mxu0
        %v1132 = vadd.f32 %v239, %v1131
        %v1133 = vpop.f32.mrb[0].mxu0
        %v1134 = vadd.f32 %v243, %v1133
        %1135 = vmatprep.mubr.f32.mxu0 0.0
        %1136 = vmatmul.mubr.f32.gmra.mrb[0].mxu0 %v892
        %v1137 = vpop.f32.mrb[0].mxu0
        %v1138 = vadd.f32 %v239, %v1137
        %v1139 = vpop.f32.mrb[0].mxu0
        %v1140 = vadd.f32 %v243, %v1139
        %1141 = vmatprep.mubr.f32.mxu0 0.0
        %1142 = vmatmul.mubr.f32.gmra.mrb[0].mxu0 %v895
        %v1143 = vpop.f32.mrb[0].mxu0
        %v1144 = vadd.f32 %v239, %v1143
        %v1145 = vpop.f32.mrb[0].mxu0
        %v1146 = vadd.f32 %v243, %v1145
        %1147 = vmatprep.mubr.f32.mxu0 0.0
        %1148 = vmatmul.mubr.f32.gmra.mrb[0].mxu0 %v898
        %v1149 = vpop.f32.mrb[0].mxu0
        %v1150 = vadd.f32 %v239, %v1149
        %v1151 = vpop.f32.mrb[0].mxu0
        %v1152 = vadd.f32 %v243, %v1151
        %1153 = vmatprep.mubr.f32.mxu0 0.0
        %1154 = vmatmul.mubr.f32.gmra.mrb[0].mxu0 %v901
        %v1155 = vpop.f32.mrb[0].mxu0
        %v1156 = vadd.f32 %v239, %v1155
        %v1157 = vpop.f32.mrb[0].mxu0
        %v1158 = vadd.f32 %v243, %v1157
        %1159 = vdwg.mxu0
        %s1160 = scalar_lea.vmem %s217, 512 [#allocation7]
        %1161 = vst [vmem:[%s1160] sm:$0xff] %v970
        %1162 = vst [vmem:[%s1160 + $0x8] sm:$0xff] %v972
        %1163 = vst [vmem:[%s1160 + $0x10] sm:$0xff] %v976
        %1164 = vst [vmem:[%s1160 + $0x18] sm:$0xff] %v978
        %1165 = vst [vmem:[%s1160 + $0x20] sm:$0xff] %v982
        %1166 = vst [vmem:[%s1160 + $0x28] sm:$0xff] %v984
        %1167 = vst [vmem:[%s1160 + $0x30] sm:$0xff] %v988
        %1168 = vst [vmem:[%s1160 + $0x38] sm:$0xff] %v990
        %1169 = vst [vmem:[%s1160 + $0x40] sm:$0xff] %v994
        %1170 = vst [vmem:[%s1160 + $0x48] sm:$0xff] %v996
        %1171 = vst [vmem:[%s1160 + $0x50] sm:$0xff] %v1000
        %1172 = vst [vmem:[%s1160 + $0x58] sm:$0xff] %v1002
        %1173 = vst [vmem:[%s1160 + $0x60] sm:$0xff] %v1006
        %1174 = vst [vmem:[%s1160 + $0x68] sm:$0xff] %v1008
        %1175 = vst [vmem:[%s1160 + $0x70] sm:$0xff] %v1012
        %1176 = vst [vmem:[%s1160 + $0x78] sm:$0xff] %v1014
        %1177 = vst [vmem:[%s1160 + $0x80] sm:$0xff] %v1018
        %1178 = vst [vmem:[%s1160 + $0x88] sm:$0xff] %v1020
        %1179 = vst [vmem:[%s1160 + $0x90] sm:$0xff] %v1024
        %1180 = vst [vmem:[%s1160 + $0x98] sm:$0xff] %v1026
        %1181 = vst [vmem:[%s1160 + $0xa0] sm:$0xff] %v1030
        %1182 = vst [vmem:[%s1160 + $0xa8] sm:$0xff] %v1032
        %1183 = vst [vmem:[%s1160 + $0xb0] sm:$0xff] %v1036
        %1184 = vst [vmem:[%s1160 + $0xb8] sm:$0xff] %v1038
        %1185 = vst [vmem:[%s1160 + $0xc0] sm:$0xff] %v1042
        %1186 = vst [vmem:[%s1160 + $0xc8] sm:$0xff] %v1044
        %1187 = vst [vmem:[%s1160 + $0xd0] sm:$0xff] %v1048
        %1188 = vst [vmem:[%s1160 + $0xd8] sm:$0xff] %v1050
        %1189 = vst [vmem:[%s1160 + $0xe0] sm:$0xff] %v1054
        %1190 = vst [vmem:[%s1160 + $0xe8] sm:$0xff] %v1056
        %1191 = vst [vmem:[%s1160 + $0xf0] sm:$0xff] %v1060
        %1192 = vst [vmem:[%s1160 + $0xf8] sm:$0xff] %v1062
        %1193 = vst [vmem:[%s1160 + $0x100] sm:$0xff] %v1066
        %1194 = vst [vmem:[%s1160 + $0x108] sm:$0xff] %v1068
        %1195 = vst [vmem:[%s1160 + $0x110] sm:$0xff] %v1072
        %1196 = vst [vmem:[%s1160 + $0x118] sm:$0xff] %v1074
        %1197 = vst [vmem:[%s1160 + $0x120] sm:$0xff] %v1078
        %1198 = vst [vmem:[%s1160 + $0x128] sm:$0xff] %v1080
        %1199 = vst [vmem:[%s1160 + $0x130] sm:$0xff] %v1084
        %1200 = vst [vmem:[%s1160 + $0x138] sm:$0xff] %v1086
        %1201 = vst [vmem:[%s1160 + $0x140] sm:$0xff] %v1090
        %1202 = vst [vmem:[%s1160 + $0x148] sm:$0xff] %v1092
        %1203 = vst [vmem:[%s1160 + $0x150] sm:$0xff] %v1096
        %1204 = vst [vmem:[%s1160 + $0x158] sm:$0xff] %v1098
        %1205 = vst [vmem:[%s1160 + $0x160] sm:$0xff] %v1102
        %1206 = vst [vmem:[%s1160 + $0x168] sm:$0xff] %v1104
        %1207 = vst [vmem:[%s1160 + $0x170] sm:$0xff] %v1108
        %1208 = vst [vmem:[%s1160 + $0x178] sm:$0xff] %v1110
        %1209 = vst [vmem:[%s1160 + $0x180] sm:$0xff] %v1114
        %1210 = vst [vmem:[%s1160 + $0x188] sm:$0xff] %v1116
        %1211 = vst [vmem:[%s1160 + $0x190] sm:$0xff] %v1120
        %1212 = vst [vmem:[%s1160 + $0x198] sm:$0xff] %v1122
        %1213 = vst [vmem:[%s1160 + $0x1a0] sm:$0xff] %v1126
        %1214 = vst [vmem:[%s1160 + $0x1a8] sm:$0xff] %v1128
        %1215 = vst [vmem:[%s1160 + $0x1b0] sm:$0xff] %v1132
        %1216 = vst [vmem:[%s1160 + $0x1b8] sm:$0xff] %v1134
        %1217 = vst [vmem:[%s1160 + $0x1c0] sm:$0xff] %v1138
        %1218 = vst [vmem:[%s1160 + $0x1c8] sm:$0xff] %v1140
        %1219 = vst [vmem:[%s1160 + $0x1d0] sm:$0xff] %v1144
        %1220 = vst [vmem:[%s1160 + $0x1d8] sm:$0xff] %v1146
        %1221 = vst [vmem:[%s1160 + $0x1e0] sm:$0xff] %v1150
        %1222 = vst [vmem:[%s1160 + $0x1e8] sm:$0xff] %v1152
        %1223 = vst [vmem:[%s1160 + $0x1f0] sm:$0xff] %v1156
        %1224 = vst [vmem:[%s1160 + $0x1f8] sm:$0xff] %v1158
        %s1225 = scalar_lea.vmem %s227, 16
        %v1226 = vld [vmem:[%s1225] sm:$0xff]
        %v1228 = vcombine.high %v1226, %v1226
        %1230 = vxpose.xlu0.b32.start [1/16] %v1226, 128
        %1231 = vxpose.xlu0.b32.cont [2/16] 0.0, 128
        %1232 = vxpose.xlu0.b32.cont [3/16] 0.0, 128
        %1233 = vxpose.xlu0.b32.cont [4/16] 0.0, 128
        %1234 = vxpose.xlu0.b32.cont [5/16] 0.0, 128
        %1235 = vxpose.xlu0.b32.cont [6/16] 0.0, 128
        %1236 = vxpose.xlu0.b32.cont [7/16] 0.0, 128
        %1237 = vxpose.xlu0.b32.cont [8/16] 0.0, 128
        %1238 = vxpose.xlu0.b32.cont [9/16] 0.0, 128
        %1239 = vxpose.xlu0.b32.cont [10/16] 0.0, 128
        %1240 = vxpose.xlu0.b32.cont [11/16] 0.0, 128
        %1241 = vxpose.xlu0.b32.cont [12/16] 0.0, 128
        %1242 = vxpose.xlu0.b32.cont [13/16] 0.0, 128
        %1243 = vxpose.xlu0.b32.cont [14/16] 0.0, 128
        %1244 = vxpose.xlu0.b32.cont [15/16] 0.0, 128
        %1245 = vxpose.xlu0.b32.end [16/16] 0.0, 128
        %v1246 = vpop.trf.xlu0
        %v1247 = vpop.trf.xlu0
        %v1248 = vpop.trf.xlu0
        %v1249 = vpop.trf.xlu0
        %v1250 = vpop.trf.xlu0
        %v1251 = vpop.trf.xlu0
        %v1252 = vpop.trf.xlu0
        %v1253 = vpop.trf.xlu0
        %v1254 = vpop.trf.xlu0
        %v1255 = vpop.trf.xlu0
        %v1256 = vpop.trf.xlu0
        %v1257 = vpop.trf.xlu0
        %v1258 = vpop.trf.xlu0
        %v1259 = vpop.trf.xlu0
        %v1260 = vpop.trf.xlu0
        %v1261 = vpop.trf.xlu0
        %1262 = vxpose.xlu0.b32.start [1/16] %v1228, 128
        %1263 = vxpose.xlu0.b32.cont [2/16] 0.0, 128
        %1264 = vxpose.xlu0.b32.cont [3/16] 0.0, 128
        %1265 = vxpose.xlu0.b32.cont [4/16] 0.0, 128
        %1266 = vxpose.xlu0.b32.cont [5/16] 0.0, 128
        %1267 = vxpose.xlu0.b32.cont [6/16] 0.0, 128
        %1268 = vxpose.xlu0.b32.cont [7/16] 0.0, 128
        %1269 = vxpose.xlu0.b32.cont [8/16] 0.0, 128
        %1270 = vxpose.xlu0.b32.cont [9/16] 0.0, 128
        %1271 = vxpose.xlu0.b32.cont [10/16] 0.0, 128
        %1272 = vxpose.xlu0.b32.cont [11/16] 0.0, 128
        %1273 = vxpose.xlu0.b32.cont [12/16] 0.0, 128
        %1274 = vxpose.xlu0.b32.cont [13/16] 0.0, 128
        %1275 = vxpose.xlu0.b32.cont [14/16] 0.0, 128
        %1276 = vxpose.xlu0.b32.cont [15/16] 0.0, 128
        %1277 = vxpose.xlu0.b32.end [16/16] 0.0, 128
        %v1278 = vpop.trf.xlu0
        %v1279 = vpop.trf.xlu0
        %v1280 = vpop.trf.xlu0
        %v1281 = vpop.trf.xlu0
        %v1282 = vpop.trf.xlu0
        %v1283 = vpop.trf.xlu0
        %v1284 = vpop.trf.xlu0
        %v1285 = vpop.trf.xlu0
        %v1286 = vpop.trf.xlu0
        %v1287 = vpop.trf.xlu0
        %v1288 = vpop.trf.xlu0
        %v1289 = vpop.trf.xlu0
        %v1290 = vpop.trf.xlu0
        %v1291 = vpop.trf.xlu0
        %v1292 = vpop.trf.xlu0
        %v1293 = vpop.trf.xlu0
        %v1295 = vsel %vm315, %v1246, 0
        %v1298 = vsel %vm315, %v1247, 0
        %v1301 = vsel %vm315, %v1248, 0
        %v1304 = vsel %vm315, %v1249, 0
        %v1307 = vsel %vm315, %v1250, 0
        %v1310 = vsel %vm315, %v1251, 0
        %v1313 = vsel %vm315, %v1252, 0
        %v1316 = vsel %vm315, %v1253, 0
        %v1319 = vsel %vm315, %v1254, 0
        %v1322 = vsel %vm315, %v1255, 0
        %v1325 = vsel %vm315, %v1256, 0
        %v1328 = vsel %vm315, %v1257, 0
        %v1331 = vsel %vm315, %v1258, 0
        %v1334 = vsel %vm315, %v1259, 0
        %v1337 = vsel %vm315, %v1260, 0
        %v1340 = vsel %vm315, %v1261, 0
        %v1343 = vsel %vm315, %v1278, 0
        %v1346 = vsel %vm315, %v1279, 0
        %v1349 = vsel %vm315, %v1280, 0
        %v1352 = vsel %vm315, %v1281, 0
        %v1355 = vsel %vm315, %v1282, 0
        %v1358 = vsel %vm315, %v1283, 0
        %v1361 = vsel %vm315, %v1284, 0
        %v1364 = vsel %vm315, %v1285, 0
        %v1367 = vsel %vm315, %v1286, 0
        %v1370 = vsel %vm315, %v1287, 0
        %v1373 = vsel %vm315, %v1288, 0
        %v1376 = vsel %vm315, %v1289, 0
        %v1379 = vsel %vm315, %v1290, 0
        %v1382 = vsel %vm315, %v1291, 0
        %v1385 = vsel %vm315, %v1292, 0
        %v1388 = vsel %vm315, %v1293, 0
        %1390 = vmatprep.subr.mxu0 %v415
        %1391 = vmatpush1.msra.mxu0 %v413
        %1392 = vmatprep.subr.mxu0 0.0
        %1393 = vmatpush1.msra.mxu0 0.0
        %1394 = vmatprep.subr.mxu0 0.0
        %1395 = vmatpush1.msra.mxu0 0.0
        %1396 = vmatprep.subr.mxu0 0.0
        %1397 = vmatpush1.msra.mxu0 0.0
        %1398 = vmatprep.subr.mxu0 0.0
        %1399 = vmatpush1.msra.mxu0 0.0
        %1400 = vmatprep.subr.mxu0 0.0
        %1401 = vmatpush1.msra.mxu0 0.0
        %1402 = vmatprep.subr.mxu0 0.0
        %1403 = vmatpush1.msra.mxu0 0.0
        %1404 = vmatprep.subr.mxu0 0.0
        %1405 = vmatpush1.msra.mxu0 0.0
        %1406 = vmatprep.subr.mxu0 0.0
        %1407 = vmatpush1.msra.mxu0 0.0
        %1408 = vmatprep.subr.mxu0 0.0
        %1409 = vmatpush1.msra.mxu0 0.0
        %1410 = vmatprep.subr.mxu0 0.0
        %1411 = vmatpush1.msra.mxu0 0.0
        %1412 = vmatprep.subr.mxu0 0.0
        %1413 = vmatpush1.msra.mxu0 0.0
        %1414 = vmatprep.subr.mxu0 0.0
        %1415 = vmatpush1.msra.mxu0 0.0
        %1416 = vmatprep.subr.mxu0 0.0
        %1417 = vmatpush1.msra.mxu0 0.0
        %1418 = vmatprep.subr.mxu0 0.0
        %1419 = vmatpush1.msra.mxu0 0.0
        %1420 = vmatprep.subr.mxu0 0.0
        %1421 = vmatpush1.msra.mxu0 0.0
        %1422 = vmatprep.subr.mxu0 0.0
        %1423 = vmatpush1.msra.mxu0 0.0
        %1424 = vmatprep.subr.mxu0 0.0
        %1425 = vmatpush1.msra.mxu0 0.0
        %1426 = vmatprep.subr.mxu0 0.0
        %1427 = vmatpush1.msra.mxu0 0.0
        %1428 = vmatprep.subr.mxu0 0.0
        %1429 = vmatpush1.msra.mxu0 0.0
        %1430 = vmatprep.subr.mxu0 0.0
        %1431 = vmatpush1.msra.mxu0 0.0
        %1432 = vmatprep.subr.mxu0 0.0
        %1433 = vmatpush1.msra.mxu0 0.0
        %1434 = vmatprep.subr.mxu0 0.0
        %1435 = vmatpush1.msra.mxu0 0.0
        %1436 = vmatprep.subr.mxu0 0.0
        %1437 = vmatpush1.msra.mxu0 0.0
        %1438 = vmatprep.subr.mxu0 0.0
        %1439 = vmatpush1.msra.mxu0 0.0
        %1440 = vmatprep.subr.mxu0 0.0
        %1441 = vmatpush1.msra.mxu0 0.0
        %1442 = vmatprep.subr.mxu0 0.0
        %1443 = vmatpush1.msra.mxu0 0.0
        %1444 = vmatprep.subr.mxu0 0.0
        %1445 = vmatpush1.msra.mxu0 0.0
        %1446 = vmatprep.subr.mxu0 0.0
        %1447 = vmatpush1.msra.mxu0 0.0
        %1448 = vmatprep.subr.mxu0 0.0
        %1449 = vmatpush1.msra.mxu0 0.0
        %1450 = vmatprep.subr.mxu0 0.0
        %1451 = vmatpush1.msra.mxu0 0.0
        %1452 = vmatprep.subr.mxu0 0.0
        %1453 = vmatpush1.msra.mxu0 0.0
        %1454 = vmatprep.mubr.f32.mxu0 0.0
        %1455 = vmatmul.mubr.f32.gmra.mrb[0].mxu0 %v1295
        %v1456 = vpop.f32.mrb[0].mxu0
        %v1457 = vadd.f32 %v239, %v1456
        %v1458 = vpop.f32.mrb[0].mxu0
        %v1459 = vadd.f32 %v243, %v1458
        %1460 = vmatprep.mubr.f32.mxu0 0.0
        %1461 = vmatmul.mubr.f32.gmra.mrb[0].mxu0 %v1298
        %v1462 = vpop.f32.mrb[0].mxu0
        %v1463 = vadd.f32 %v239, %v1462
        %v1464 = vpop.f32.mrb[0].mxu0
        %v1465 = vadd.f32 %v243, %v1464
        %1466 = vmatprep.mubr.f32.mxu0 0.0
        %1467 = vmatmul.mubr.f32.gmra.mrb[0].mxu0 %v1301
        %v1468 = vpop.f32.mrb[0].mxu0
        %v1469 = vadd.f32 %v239, %v1468
        %v1470 = vpop.f32.mrb[0].mxu0
        %v1471 = vadd.f32 %v243, %v1470
        %1472 = vmatprep.mubr.f32.mxu0 0.0
        %1473 = vmatmul.mubr.f32.gmra.mrb[0].mxu0 %v1304
        %v1474 = vpop.f32.mrb[0].mxu0
        %v1475 = vadd.f32 %v239, %v1474
        %v1476 = vpop.f32.mrb[0].mxu0
        %v1477 = vadd.f32 %v243, %v1476
        %1478 = vmatprep.mubr.f32.mxu0 0.0
        %1479 = vmatmul.mubr.f32.gmra.mrb[0].mxu0 %v1307
        %v1480 = vpop.f32.mrb[0].mxu0
        %v1481 = vadd.f32 %v239, %v1480
        %v1482 = vpop.f32.mrb[0].mxu0
        %v1483 = vadd.f32 %v243, %v1482
        %1484 = vmatprep.mubr.f32.mxu0 0.0
        %1485 = vmatmul.mubr.f32.gmra.mrb[0].mxu0 %v1310
        %v1486 = vpop.f32.mrb[0].mxu0
        %v1487 = vadd.f32 %v239, %v1486
        %v1488 = vpop.f32.mrb[0].mxu0
        %v1489 = vadd.f32 %v243, %v1488
        %1490 = vmatprep.mubr.f32.mxu0 0.0
        %1491 = vmatmul.mubr.f32.gmra.mrb[0].mxu0 %v1313
        %v1492 = vpop.f32.mrb[0].mxu0
        %v1493 = vadd.f32 %v239, %v1492
        %v1494 = vpop.f32.mrb[0].mxu0
        %v1495 = vadd.f32 %v243, %v1494
        %1496 = vmatprep.mubr.f32.mxu0 0.0
        %1497 = vmatmul.mubr.f32.gmra.mrb[0].mxu0 %v1316
        %v1498 = vpop.f32.mrb[0].mxu0
        %v1499 = vadd.f32 %v239, %v1498
        %v1500 = vpop.f32.mrb[0].mxu0
        %v1501 = vadd.f32 %v243, %v1500
        %1502 = vmatprep.mubr.f32.mxu0 0.0
        %1503 = vmatmul.mubr.f32.gmra.mrb[0].mxu0 %v1319
        %v1504 = vpop.f32.mrb[0].mxu0
        %v1505 = vadd.f32 %v239, %v1504
        %v1506 = vpop.f32.mrb[0].mxu0
        %v1507 = vadd.f32 %v243, %v1506
        %1508 = vmatprep.mubr.f32.mxu0 0.0
        %1509 = vmatmul.mubr.f32.gmra.mrb[0].mxu0 %v1322
        %v1510 = vpop.f32.mrb[0].mxu0
        %v1511 = vadd.f32 %v239, %v1510
        %v1512 = vpop.f32.mrb[0].mxu0
        %v1513 = vadd.f32 %v243, %v1512
        %1514 = vmatprep.mubr.f32.mxu0 0.0
        %1515 = vmatmul.mubr.f32.gmra.mrb[0].mxu0 %v1325
        %v1516 = vpop.f32.mrb[0].mxu0
        %v1517 = vadd.f32 %v239, %v1516
        %v1518 = vpop.f32.mrb[0].mxu0
        %v1519 = vadd.f32 %v243, %v1518
        %1520 = vmatprep.mubr.f32.mxu0 0.0
        %1521 = vmatmul.mubr.f32.gmra.mrb[0].mxu0 %v1328
        %v1522 = vpop.f32.mrb[0].mxu0
        %v1523 = vadd.f32 %v239, %v1522
        %v1524 = vpop.f32.mrb[0].mxu0
        %v1525 = vadd.f32 %v243, %v1524
        %1526 = vmatprep.mubr.f32.mxu0 0.0
        %1527 = vmatmul.mubr.f32.gmra.mrb[0].mxu0 %v1331
        %v1528 = vpop.f32.mrb[0].mxu0
        %v1529 = vadd.f32 %v239, %v1528
        %v1530 = vpop.f32.mrb[0].mxu0
        %v1531 = vadd.f32 %v243, %v1530
        %1532 = vmatprep.mubr.f32.mxu0 0.0
        %1533 = vmatmul.mubr.f32.gmra.mrb[0].mxu0 %v1334
        %v1534 = vpop.f32.mrb[0].mxu0
        %v1535 = vadd.f32 %v239, %v1534
        %v1536 = vpop.f32.mrb[0].mxu0
        %v1537 = vadd.f32 %v243, %v1536
        %1538 = vmatprep.mubr.f32.mxu0 0.0
        %1539 = vmatmul.mubr.f32.gmra.mrb[0].mxu0 %v1337
        %v1540 = vpop.f32.mrb[0].mxu0
        %v1541 = vadd.f32 %v239, %v1540
        %v1542 = vpop.f32.mrb[0].mxu0
        %v1543 = vadd.f32 %v243, %v1542
        %1544 = vmatprep.mubr.f32.mxu0 0.0
        %1545 = vmatmul.mubr.f32.gmra.mrb[0].mxu0 %v1340
        %v1546 = vpop.f32.mrb[0].mxu0
        %v1547 = vadd.f32 %v239, %v1546
        %v1548 = vpop.f32.mrb[0].mxu0
        %v1549 = vadd.f32 %v243, %v1548
        %1550 = vmatprep.mubr.f32.mxu0 0.0
        %1551 = vmatmul.mubr.f32.gmra.mrb[0].mxu0 %v1343
        %v1552 = vpop.f32.mrb[0].mxu0
        %v1553 = vadd.f32 %v239, %v1552
        %v1554 = vpop.f32.mrb[0].mxu0
        %v1555 = vadd.f32 %v243, %v1554
        %1556 = vmatprep.mubr.f32.mxu0 0.0
        %1557 = vmatmul.mubr.f32.gmra.mrb[0].mxu0 %v1346
        %v1558 = vpop.f32.mrb[0].mxu0
        %v1559 = vadd.f32 %v239, %v1558
        %v1560 = vpop.f32.mrb[0].mxu0
        %v1561 = vadd.f32 %v243, %v1560
        %1562 = vmatprep.mubr.f32.mxu0 0.0
        %1563 = vmatmul.mubr.f32.gmra.mrb[0].mxu0 %v1349
        %v1564 = vpop.f32.mrb[0].mxu0
        %v1565 = vadd.f32 %v239, %v1564
        %v1566 = vpop.f32.mrb[0].mxu0
        %v1567 = vadd.f32 %v243, %v1566
        %1568 = vmatprep.mubr.f32.mxu0 0.0
        %1569 = vmatmul.mubr.f32.gmra.mrb[0].mxu0 %v1352
        %v1570 = vpop.f32.mrb[0].mxu0
        %v1571 = vadd.f32 %v239, %v1570
        %v1572 = vpop.f32.mrb[0].mxu0
        %v1573 = vadd.f32 %v243, %v1572
        %1574 = vmatprep.mubr.f32.mxu0 0.0
        %1575 = vmatmul.mubr.f32.gmra.mrb[0].mxu0 %v1355
        %v1576 = vpop.f32.mrb[0].mxu0
        %v1577 = vadd.f32 %v239, %v1576
        %v1578 = vpop.f32.mrb[0].mxu0
        %v1579 = vadd.f32 %v243, %v1578
        %1580 = vmatprep.mubr.f32.mxu0 0.0
        %1581 = vmatmul.mubr.f32.gmra.mrb[0].mxu0 %v1358
        %v1582 = vpop.f32.mrb[0].mxu0
        %v1583 = vadd.f32 %v239, %v1582
        %v1584 = vpop.f32.mrb[0].mxu0
        %v1585 = vadd.f32 %v243, %v1584
        %1586 = vmatprep.mubr.f32.mxu0 0.0
        %1587 = vmatmul.mubr.f32.gmra.mrb[0].mxu0 %v1361
        %v1588 = vpop.f32.mrb[0].mxu0
        %v1589 = vadd.f32 %v239, %v1588
        %v1590 = vpop.f32.mrb[0].mxu0
        %v1591 = vadd.f32 %v243, %v1590
        %1592 = vmatprep.mubr.f32.mxu0 0.0
        %1593 = vmatmul.mubr.f32.gmra.mrb[0].mxu0 %v1364
        %v1594 = vpop.f32.mrb[0].mxu0
        %v1595 = vadd.f32 %v239, %v1594
        %v1596 = vpop.f32.mrb[0].mxu0
        %v1597 = vadd.f32 %v243, %v1596
        %1598 = vmatprep.mubr.f32.mxu0 0.0
        %1599 = vmatmul.mubr.f32.gmra.mrb[0].mxu0 %v1367
        %v1600 = vpop.f32.mrb[0].mxu0
        %v1601 = vadd.f32 %v239, %v1600
        %v1602 = vpop.f32.mrb[0].mxu0
        %v1603 = vadd.f32 %v243, %v1602
        %1604 = vmatprep.mubr.f32.mxu0 0.0
        %1605 = vmatmul.mubr.f32.gmra.mrb[0].mxu0 %v1370
        %v1606 = vpop.f32.mrb[0].mxu0
        %v1607 = vadd.f32 %v239, %v1606
        %v1608 = vpop.f32.mrb[0].mxu0
        %v1609 = vadd.f32 %v243, %v1608
        %1610 = vmatprep.mubr.f32.mxu0 0.0
        %1611 = vmatmul.mubr.f32.gmra.mrb[0].mxu0 %v1373
        %v1612 = vpop.f32.mrb[0].mxu0
        %v1613 = vadd.f32 %v239, %v1612
        %v1614 = vpop.f32.mrb[0].mxu0
        %v1615 = vadd.f32 %v243, %v1614
        %1616 = vmatprep.mubr.f32.mxu0 0.0
        %1617 = vmatmul.mubr.f32.gmra.mrb[0].mxu0 %v1376
        %v1618 = vpop.f32.mrb[0].mxu0
        %v1619 = vadd.f32 %v239, %v1618
        %v1620 = vpop.f32.mrb[0].mxu0
        %v1621 = vadd.f32 %v243, %v1620
        %1622 = vmatprep.mubr.f32.mxu0 0.0
        %1623 = vmatmul.mubr.f32.gmra.mrb[0].mxu0 %v1379
        %v1624 = vpop.f32.mrb[0].mxu0
        %v1625 = vadd.f32 %v239, %v1624
        %v1626 = vpop.f32.mrb[0].mxu0
        %v1627 = vadd.f32 %v243, %v1626
        %1628 = vmatprep.mubr.f32.mxu0 0.0
        %1629 = vmatmul.mubr.f32.gmra.mrb[0].mxu0 %v1382
        %v1630 = vpop.f32.mrb[0].mxu0
        %v1631 = vadd.f32 %v239, %v1630
        %v1632 = vpop.f32.mrb[0].mxu0
        %v1633 = vadd.f32 %v243, %v1632
        %1634 = vmatprep.mubr.f32.mxu0 0.0
        %1635 = vmatmul.mubr.f32.gmra.mrb[0].mxu0 %v1385
        %v1636 = vpop.f32.mrb[0].mxu0
        %v1637 = vadd.f32 %v239, %v1636
        %v1638 = vpop.f32.mrb[0].mxu0
        %v1639 = vadd.f32 %v243, %v1638
        %1640 = vmatprep.mubr.f32.mxu0 0.0
        %1641 = vmatmul.mubr.f32.gmra.mrb[0].mxu0 %v1388
        %v1642 = vpop.f32.mrb[0].mxu0
        %v1643 = vadd.f32 %v239, %v1642
        %v1644 = vpop.f32.mrb[0].mxu0
        %v1645 = vadd.f32 %v243, %v1644
        %1646 = vdwg.mxu0
        %s1647 = scalar_lea.vmem %s217, 1024 [#allocation7]
        %1648 = vst [vmem:[%s1647] sm:$0xff] %v1457
        %1649 = vst [vmem:[%s1647 + $0x8] sm:$0xff] %v1459
        %1650 = vst [vmem:[%s1647 + $0x10] sm:$0xff] %v1463
        %1651 = vst [vmem:[%s1647 + $0x18] sm:$0xff] %v1465
        %1652 = vst [vmem:[%s1647 + $0x20] sm:$0xff] %v1469
        %1653 = vst [vmem:[%s1647 + $0x28] sm:$0xff] %v1471
        %1654 = vst [vmem:[%s1647 + $0x30] sm:$0xff] %v1475
        %1655 = vst [vmem:[%s1647 + $0x38] sm:$0xff] %v1477
        %1656 = vst [vmem:[%s1647 + $0x40] sm:$0xff] %v1481
        %1657 = vst [vmem:[%s1647 + $0x48] sm:$0xff] %v1483
        %1658 = vst [vmem:[%s1647 + $0x50] sm:$0xff] %v1487
        %1659 = vst [vmem:[%s1647 + $0x58] sm:$0xff] %v1489
        %1660 = vst [vmem:[%s1647 + $0x60] sm:$0xff] %v1493
        %1661 = vst [vmem:[%s1647 + $0x68] sm:$0xff] %v1495
        %1662 = vst [vmem:[%s1647 + $0x70] sm:$0xff] %v1499
        %1663 = vst [vmem:[%s1647 + $0x78] sm:$0xff] %v1501
        %1664 = vst [vmem:[%s1647 + $0x80] sm:$0xff] %v1505
        %1665 = vst [vmem:[%s1647 + $0x88] sm:$0xff] %v1507
        %1666 = vst [vmem:[%s1647 + $0x90] sm:$0xff] %v1511
        %1667 = vst [vmem:[%s1647 + $0x98] sm:$0xff] %v1513
        %1668 = vst [vmem:[%s1647 + $0xa0] sm:$0xff] %v1517
        %1669 = vst [vmem:[%s1647 + $0xa8] sm:$0xff] %v1519
        %1670 = vst [vmem:[%s1647 + $0xb0] sm:$0xff] %v1523
        %1671 = vst [vmem:[%s1647 + $0xb8] sm:$0xff] %v1525
        %1672 = vst [vmem:[%s1647 + $0xc0] sm:$0xff] %v1529
        %1673 = vst [vmem:[%s1647 + $0xc8] sm:$0xff] %v1531
        %1674 = vst [vmem:[%s1647 + $0xd0] sm:$0xff] %v1535
        %1675 = vst [vmem:[%s1647 + $0xd8] sm:$0xff] %v1537
        %1676 = vst [vmem:[%s1647 + $0xe0] sm:$0xff] %v1541
        %1677 = vst [vmem:[%s1647 + $0xe8] sm:$0xff] %v1543
        %1678 = vst [vmem:[%s1647 + $0xf0] sm:$0xff] %v1547
        %1679 = vst [vmem:[%s1647 + $0xf8] sm:$0xff] %v1549
        %1680 = vst [vmem:[%s1647 + $0x100] sm:$0xff] %v1553
        %1681 = vst [vmem:[%s1647 + $0x108] sm:$0xff] %v1555
        %1682 = vst [vmem:[%s1647 + $0x110] sm:$0xff] %v1559
        %1683 = vst [vmem:[%s1647 + $0x118] sm:$0xff] %v1561
        %1684 = vst [vmem:[%s1647 + $0x120] sm:$0xff] %v1565
        %1685 = vst [vmem:[%s1647 + $0x128] sm:$0xff] %v1567
        %1686 = vst [vmem:[%s1647 + $0x130] sm:$0xff] %v1571
        %1687 = vst [vmem:[%s1647 + $0x138] sm:$0xff] %v1573
        %1688 = vst [vmem:[%s1647 + $0x140] sm:$0xff] %v1577
        %1689 = vst [vmem:[%s1647 + $0x148] sm:$0xff] %v1579
        %1690 = vst [vmem:[%s1647 + $0x150] sm:$0xff] %v1583
        %1691 = vst [vmem:[%s1647 + $0x158] sm:$0xff] %v1585
        %1692 = vst [vmem:[%s1647 + $0x160] sm:$0xff] %v1589
        %1693 = vst [vmem:[%s1647 + $0x168] sm:$0xff] %v1591
        %1694 = vst [vmem:[%s1647 + $0x170] sm:$0xff] %v1595
        %1695 = vst [vmem:[%s1647 + $0x178] sm:$0xff] %v1597
        %1696 = vst [vmem:[%s1647 + $0x180] sm:$0xff] %v1601
        %1697 = vst [vmem:[%s1647 + $0x188] sm:$0xff] %v1603
        %1698 = vst [vmem:[%s1647 + $0x190] sm:$0xff] %v1607
        %1699 = vst [vmem:[%s1647 + $0x198] sm:$0xff] %v1609
        %1700 = vst [vmem:[%s1647 + $0x1a0] sm:$0xff] %v1613
        %1701 = vst [vmem:[%s1647 + $0x1a8] sm:$0xff] %v1615
        %1702 = vst [vmem:[%s1647 + $0x1b0] sm:$0xff] %v1619
        %1703 = vst [vmem:[%s1647 + $0x1b8] sm:$0xff] %v1621
        %1704 = vst [vmem:[%s1647 + $0x1c0] sm:$0xff] %v1625
        %1705 = vst [vmem:[%s1647 + $0x1c8] sm:$0xff] %v1627
        %1706 = vst [vmem:[%s1647 + $0x1d0] sm:$0xff] %v1631
        %1707 = vst [vmem:[%s1647 + $0x1d8] sm:$0xff] %v1633
        %1708 = vst [vmem:[%s1647 + $0x1e0] sm:$0xff] %v1637
        %1709 = vst [vmem:[%s1647 + $0x1e8] sm:$0xff] %v1639
        %1710 = vst [vmem:[%s1647 + $0x1f0] sm:$0xff] %v1643
        %1711 = vst [vmem:[%s1647 + $0x1f8] sm:$0xff] %v1645
        %s1712 = scalar_lea.vmem %s227, 24
        %v1713 = vld [vmem:[%s1712] sm:$0xff]
        %v1715 = vcombine.high %v1713, %v1713
        %1717 = vxpose.xlu0.b32.start [1/16] %v1713, 128
        %1718 = vxpose.xlu0.b32.cont [2/16] 0.0, 128
        %1719 = vxpose.xlu0.b32.cont [3/16] 0.0, 128
        %1720 = vxpose.xlu0.b32.cont [4/16] 0.0, 128
        %1721 = vxpose.xlu0.b32.cont [5/16] 0.0, 128
        %1722 = vxpose.xlu0.b32.cont [6/16] 0.0, 128
        %1723 = vxpose.xlu0.b32.cont [7/16] 0.0, 128
        %1724 = vxpose.xlu0.b32.cont [8/16] 0.0, 128
        %1725 = vxpose.xlu0.b32.cont [9/16] 0.0, 128
        %1726 = vxpose.xlu0.b32.cont [10/16] 0.0, 128
        %1727 = vxpose.xlu0.b32.cont [11/16] 0.0, 128
        %1728 = vxpose.xlu0.b32.cont [12/16] 0.0, 128
        %1729 = vxpose.xlu0.b32.cont [13/16] 0.0, 128
        %1730 = vxpose.xlu0.b32.cont [14/16] 0.0, 128
        %1731 = vxpose.xlu0.b32.cont [15/16] 0.0, 128
        %1732 = vxpose.xlu0.b32.end [16/16] 0.0, 128
        %v1733 = vpop.trf.xlu0
        %v1734 = vpop.trf.xlu0
        %v1735 = vpop.trf.xlu0
        %v1736 = vpop.trf.xlu0
        %v1737 = vpop.trf.xlu0
        %v1738 = vpop.trf.xlu0
        %v1739 = vpop.trf.xlu0
        %v1740 = vpop.trf.xlu0
        %v1741 = vpop.trf.xlu0
        %v1742 = vpop.trf.xlu0
        %v1743 = vpop.trf.xlu0
        %v1744 = vpop.trf.xlu0
        %v1745 = vpop.trf.xlu0
        %v1746 = vpop.trf.xlu0
        %v1747 = vpop.trf.xlu0
        %v1748 = vpop.trf.xlu0
        %1749 = vxpose.xlu0.b32.start [1/16] %v1715, 128
        %1750 = vxpose.xlu0.b32.cont [2/16] 0.0, 128
        %1751 = vxpose.xlu0.b32.cont [3/16] 0.0, 128
        %1752 = vxpose.xlu0.b32.cont [4/16] 0.0, 128
        %1753 = vxpose.xlu0.b32.cont [5/16] 0.0, 128
        %1754 = vxpose.xlu0.b32.cont [6/16] 0.0, 128
        %1755 = vxpose.xlu0.b32.cont [7/16] 0.0, 128
        %1756 = vxpose.xlu0.b32.cont [8/16] 0.0, 128
        %1757 = vxpose.xlu0.b32.cont [9/16] 0.0, 128
        %1758 = vxpose.xlu0.b32.cont [10/16] 0.0, 128
        %1759 = vxpose.xlu0.b32.cont [11/16] 0.0, 128
        %1760 = vxpose.xlu0.b32.cont [12/16] 0.0, 128
        %1761 = vxpose.xlu0.b32.cont [13/16] 0.0, 128
        %1762 = vxpose.xlu0.b32.cont [14/16] 0.0, 128
        %1763 = vxpose.xlu0.b32.cont [15/16] 0.0, 128
        %1764 = vxpose.xlu0.b32.end [16/16] 0.0, 128
        %v1765 = vpop.trf.xlu0
        %v1766 = vpop.trf.xlu0
        %v1767 = vpop.trf.xlu0
        %v1768 = vpop.trf.xlu0
        %v1769 = vpop.trf.xlu0
        %v1770 = vpop.trf.xlu0
        %v1771 = vpop.trf.xlu0
        %v1772 = vpop.trf.xlu0
        %v1773 = vpop.trf.xlu0
        %v1774 = vpop.trf.xlu0
        %v1775 = vpop.trf.xlu0
        %v1776 = vpop.trf.xlu0
        %v1777 = vpop.trf.xlu0
        %v1778 = vpop.trf.xlu0
        %v1779 = vpop.trf.xlu0
        %v1780 = vpop.trf.xlu0
        %v1782 = vsel %vm315, %v1733, 0
        %v1785 = vsel %vm315, %v1734, 0
        %v1788 = vsel %vm315, %v1735, 0
        %v1791 = vsel %vm315, %v1736, 0
        %v1794 = vsel %vm315, %v1737, 0
        %v1797 = vsel %vm315, %v1738, 0
        %v1800 = vsel %vm315, %v1739, 0
        %v1803 = vsel %vm315, %v1740, 0
        %v1806 = vsel %vm315, %v1741, 0
        %v1809 = vsel %vm315, %v1742, 0
        %v1812 = vsel %vm315, %v1743, 0
        %v1815 = vsel %vm315, %v1744, 0
        %v1818 = vsel %vm315, %v1745, 0
        %v1821 = vsel %vm315, %v1746, 0
        %v1824 = vsel %vm315, %v1747, 0
        %v1827 = vsel %vm315, %v1748, 0
        %v1830 = vsel %vm315, %v1765, 0
        %v1833 = vsel %vm315, %v1766, 0
        %v1836 = vsel %vm315, %v1767, 0
        %v1839 = vsel %vm315, %v1768, 0
        %v1842 = vsel %vm315, %v1769, 0
        %v1845 = vsel %vm315, %v1770, 0
        %v1848 = vsel %vm315, %v1771, 0
        %v1851 = vsel %vm315, %v1772, 0
        %v1854 = vsel %vm315, %v1773, 0
        %v1857 = vsel %vm315, %v1774, 0
        %v1860 = vsel %vm315, %v1775, 0
        %v1863 = vsel %vm315, %v1776, 0
        %v1866 = vsel %vm315, %v1777, 0
        %v1869 = vsel %vm315, %v1778, 0
        %v1872 = vsel %vm315, %v1779, 0
        %v1875 = vsel %vm315, %v1780, 0
        %1877 = vmatprep.subr.mxu0 %v415
        %1878 = vmatpush1.msra.mxu0 %v413
        %1879 = vmatprep.subr.mxu0 0.0
        %1880 = vmatpush1.msra.mxu0 0.0
        %1881 = vmatprep.subr.mxu0 0.0
        %1882 = vmatpush1.msra.mxu0 0.0
        %1883 = vmatprep.subr.mxu0 0.0
        %1884 = vmatpush1.msra.mxu0 0.0
        %1885 = vmatprep.subr.mxu0 0.0
        %1886 = vmatpush1.msra.mxu0 0.0
        %1887 = vmatprep.subr.mxu0 0.0
        %1888 = vmatpush1.msra.mxu0 0.0
        %1889 = vmatprep.subr.mxu0 0.0
        %1890 = vmatpush1.msra.mxu0 0.0
        %1891 = vmatprep.subr.mxu0 0.0
        %1892 = vmatpush1.msra.mxu0 0.0
        %1893 = vmatprep.subr.mxu0 0.0
        %1894 = vmatpush1.msra.mxu0 0.0
        %1895 = vmatprep.subr.mxu0 0.0
        %1896 = vmatpush1.msra.mxu0 0.0
        %1897 = vmatprep.subr.mxu0 0.0
        %1898 = vmatpush1.msra.mxu0 0.0
        %1899 = vmatprep.subr.mxu0 0.0
        %1900 = vmatpush1.msra.mxu0 0.0
        %1901 = vmatprep.subr.mxu0 0.0
        %1902 = vmatpush1.msra.mxu0 0.0
        %1903 = vmatprep.subr.mxu0 0.0
        %1904 = vmatpush1.msra.mxu0 0.0
        %1905 = vmatprep.subr.mxu0 0.0
        %1906 = vmatpush1.msra.mxu0 0.0
        %1907 = vmatprep.subr.mxu0 0.0
        %1908 = vmatpush1.msra.mxu0 0.0
        %1909 = vmatprep.subr.mxu0 0.0
        %1910 = vmatpush1.msra.mxu0 0.0
        %1911 = vmatprep.subr.mxu0 0.0
        %1912 = vmatpush1.msra.mxu0 0.0
        %1913 = vmatprep.subr.mxu0 0.0
        %1914 = vmatpush1.msra.mxu0 0.0
        %1915 = vmatprep.subr.mxu0 0.0
        %1916 = vmatpush1.msra.mxu0 0.0
        %1917 = vmatprep.subr.mxu0 0.0
        %1918 = vmatpush1.msra.mxu0 0.0
        %1919 = vmatprep.subr.mxu0 0.0
        %1920 = vmatpush1.msra.mxu0 0.0
        %1921 = vmatprep.subr.mxu0 0.0
        %1922 = vmatpush1.msra.mxu0 0.0
        %1923 = vmatprep.subr.mxu0 0.0
        %1924 = vmatpush1.msra.mxu0 0.0
        %1925 = vmatprep.subr.mxu0 0.0
        %1926 = vmatpush1.msra.mxu0 0.0
        %1927 = vmatprep.subr.mxu0 0.0
        %1928 = vmatpush1.msra.mxu0 0.0
        %1929 = vmatprep.subr.mxu0 0.0
        %1930 = vmatpush1.msra.mxu0 0.0
        %1931 = vmatprep.subr.mxu0 0.0
        %1932 = vmatpush1.msra.mxu0 0.0
        %1933 = vmatprep.subr.mxu0 0.0
        %1934 = vmatpush1.msra.mxu0 0.0
        %1935 = vmatprep.subr.mxu0 0.0
        %1936 = vmatpush1.msra.mxu0 0.0
        %1937 = vmatprep.subr.mxu0 0.0
        %1938 = vmatpush1.msra.mxu0 0.0
        %1939 = vmatprep.subr.mxu0 0.0
        %1940 = vmatpush1.msra.mxu0 0.0
        %1941 = vmatprep.mubr.f32.mxu0 0.0
        %1942 = vmatmul.mubr.f32.gmra.mrb[0].mxu0 %v1782
        %v1943 = vpop.f32.mrb[0].mxu0
        %v1944 = vadd.f32 %v239, %v1943
        %v1945 = vpop.f32.mrb[0].mxu0
        %v1946 = vadd.f32 %v243, %v1945
        %1947 = vmatprep.mubr.f32.mxu0 0.0
        %1948 = vmatmul.mubr.f32.gmra.mrb[0].mxu0 %v1785
        %v1949 = vpop.f32.mrb[0].mxu0
        %v1950 = vadd.f32 %v239, %v1949
        %v1951 = vpop.f32.mrb[0].mxu0
        %v1952 = vadd.f32 %v243, %v1951
        %1953 = vmatprep.mubr.f32.mxu0 0.0
        %1954 = vmatmul.mubr.f32.gmra.mrb[0].mxu0 %v1788
        %v1955 = vpop.f32.mrb[0].mxu0
        %v1956 = vadd.f32 %v239, %v1955
        %v1957 = vpop.f32.mrb[0].mxu0
        %v1958 = vadd.f32 %v243, %v1957
        %1959 = vmatprep.mubr.f32.mxu0 0.0
        %1960 = vmatmul.mubr.f32.gmra.mrb[0].mxu0 %v1791
        %v1961 = vpop.f32.mrb[0].mxu0
        %v1962 = vadd.f32 %v239, %v1961
        %v1963 = vpop.f32.mrb[0].mxu0
        %v1964 = vadd.f32 %v243, %v1963
        %1965 = vmatprep.mubr.f32.mxu0 0.0
        %1966 = vmatmul.mubr.f32.gmra.mrb[0].mxu0 %v1794
        %v1967 = vpop.f32.mrb[0].mxu0
        %v1968 = vadd.f32 %v239, %v1967
        %v1969 = vpop.f32.mrb[0].mxu0
        %v1970 = vadd.f32 %v243, %v1969
        %1971 = vmatprep.mubr.f32.mxu0 0.0
        %1972 = vmatmul.mubr.f32.gmra.mrb[0].mxu0 %v1797
        %v1973 = vpop.f32.mrb[0].mxu0
        %v1974 = vadd.f32 %v239, %v1973
        %v1975 = vpop.f32.mrb[0].mxu0
        %v1976 = vadd.f32 %v243, %v1975
        %1977 = vmatprep.mubr.f32.mxu0 0.0
        %1978 = vmatmul.mubr.f32.gmra.mrb[0].mxu0 %v1800
        %v1979 = vpop.f32.mrb[0].mxu0
        %v1980 = vadd.f32 %v239, %v1979
        %v1981 = vpop.f32.mrb[0].mxu0
        %v1982 = vadd.f32 %v243, %v1981
        %1983 = vmatprep.mubr.f32.mxu0 0.0
        %1984 = vmatmul.mubr.f32.gmra.mrb[0].mxu0 %v1803
        %v1985 = vpop.f32.mrb[0].mxu0
        %v1986 = vadd.f32 %v239, %v1985
        %v1987 = vpop.f32.mrb[0].mxu0
        %v1988 = vadd.f32 %v243, %v1987
        %1989 = vmatprep.mubr.f32.mxu0 0.0
        %1990 = vmatmul.mubr.f32.gmra.mrb[0].mxu0 %v1806
        %v1991 = vpop.f32.mrb[0].mxu0
        %v1992 = vadd.f32 %v239, %v1991
        %v1993 = vpop.f32.mrb[0].mxu0
        %v1994 = vadd.f32 %v243, %v1993
        %1995 = vmatprep.mubr.f32.mxu0 0.0
        %1996 = vmatmul.mubr.f32.gmra.mrb[0].mxu0 %v1809
        %v1997 = vpop.f32.mrb[0].mxu0
        %v1998 = vadd.f32 %v239, %v1997
        %v1999 = vpop.f32.mrb[0].mxu0
        %v2000 = vadd.f32 %v243, %v1999
        %2001 = vmatprep.mubr.f32.mxu0 0.0
        %2002 = vmatmul.mubr.f32.gmra.mrb[0].mxu0 %v1812
        %v2003 = vpop.f32.mrb[0].mxu0
        %v2004 = vadd.f32 %v239, %v2003
        %v2005 = vpop.f32.mrb[0].mxu0
        %v2006 = vadd.f32 %v243, %v2005
        %2007 = vmatprep.mubr.f32.mxu0 0.0
        %2008 = vmatmul.mubr.f32.gmra.mrb[0].mxu0 %v1815
        %v2009 = vpop.f32.mrb[0].mxu0
        %v2010 = vadd.f32 %v239, %v2009
        %v2011 = vpop.f32.mrb[0].mxu0
        %v2012 = vadd.f32 %v243, %v2011
        %2013 = vmatprep.mubr.f32.mxu0 0.0
        %2014 = vmatmul.mubr.f32.gmra.mrb[0].mxu0 %v1818
        %v2015 = vpop.f32.mrb[0].mxu0
        %v2016 = vadd.f32 %v239, %v2015
        %v2017 = vpop.f32.mrb[0].mxu0
        %v2018 = vadd.f32 %v243, %v2017
        %2019 = vmatprep.mubr.f32.mxu0 0.0
        %2020 = vmatmul.mubr.f32.gmra.mrb[0].mxu0 %v1821
        %v2021 = vpop.f32.mrb[0].mxu0
        %v2022 = vadd.f32 %v239, %v2021
        %v2023 = vpop.f32.mrb[0].mxu0
        %v2024 = vadd.f32 %v243, %v2023
        %2025 = vmatprep.mubr.f32.mxu0 0.0
        %2026 = vmatmul.mubr.f32.gmra.mrb[0].mxu0 %v1824
        %v2027 = vpop.f32.mrb[0].mxu0
        %v2028 = vadd.f32 %v239, %v2027
        %v2029 = vpop.f32.mrb[0].mxu0
        %v2030 = vadd.f32 %v243, %v2029
        %2031 = vmatprep.mubr.f32.mxu0 0.0
        %2032 = vmatmul.mubr.f32.gmra.mrb[0].mxu0 %v1827
        %v2033 = vpop.f32.mrb[0].mxu0
        %v2034 = vadd.f32 %v239, %v2033
        %v2035 = vpop.f32.mrb[0].mxu0
        %v2036 = vadd.f32 %v243, %v2035
        %2037 = vmatprep.mubr.f32.mxu0 0.0
        %2038 = vmatmul.mubr.f32.gmra.mrb[0].mxu0 %v1830
        %v2039 = vpop.f32.mrb[0].mxu0
        %v2040 = vadd.f32 %v239, %v2039
        %v2041 = vpop.f32.mrb[0].mxu0
        %v2042 = vadd.f32 %v243, %v2041
        %2043 = vmatprep.mubr.f32.mxu0 0.0
        %2044 = vmatmul.mubr.f32.gmra.mrb[0].mxu0 %v1833
        %v2045 = vpop.f32.mrb[0].mxu0
        %v2046 = vadd.f32 %v239, %v2045
        %v2047 = vpop.f32.mrb[0].mxu0
        %v2048 = vadd.f32 %v243, %v2047
        %2049 = vmatprep.mubr.f32.mxu0 0.0
        %2050 = vmatmul.mubr.f32.gmra.mrb[0].mxu0 %v1836
        %v2051 = vpop.f32.mrb[0].mxu0
        %v2052 = vadd.f32 %v239, %v2051
        %v2053 = vpop.f32.mrb[0].mxu0
        %v2054 = vadd.f32 %v243, %v2053
        %2055 = vmatprep.mubr.f32.mxu0 0.0
        %2056 = vmatmul.mubr.f32.gmra.mrb[0].mxu0 %v1839
        %v2057 = vpop.f32.mrb[0].mxu0
        %v2058 = vadd.f32 %v239, %v2057
        %v2059 = vpop.f32.mrb[0].mxu0
        %v2060 = vadd.f32 %v243, %v2059
        %2061 = vmatprep.mubr.f32.mxu0 0.0
        %2062 = vmatmul.mubr.f32.gmra.mrb[0].mxu0 %v1842
        %v2063 = vpop.f32.mrb[0].mxu0
        %v2064 = vadd.f32 %v239, %v2063
        %v2065 = vpop.f32.mrb[0].mxu0
        %v2066 = vadd.f32 %v243, %v2065
        %2067 = vmatprep.mubr.f32.mxu0 0.0
        %2068 = vmatmul.mubr.f32.gmra.mrb[0].mxu0 %v1845
        %v2069 = vpop.f32.mrb[0].mxu0
        %v2070 = vadd.f32 %v239, %v2069
        %v2071 = vpop.f32.mrb[0].mxu0
        %v2072 = vadd.f32 %v243, %v2071
        %2073 = vmatprep.mubr.f32.mxu0 0.0
        %2074 = vmatmul.mubr.f32.gmra.mrb[0].mxu0 %v1848
        %v2075 = vpop.f32.mrb[0].mxu0
        %v2076 = vadd.f32 %v239, %v2075
        %v2077 = vpop.f32.mrb[0].mxu0
        %v2078 = vadd.f32 %v243, %v2077
        %2079 = vmatprep.mubr.f32.mxu0 0.0
        %2080 = vmatmul.mubr.f32.gmra.mrb[0].mxu0 %v1851
        %v2081 = vpop.f32.mrb[0].mxu0
        %v2082 = vadd.f32 %v239, %v2081
        %v2083 = vpop.f32.mrb[0].mxu0
        %v2084 = vadd.f32 %v243, %v2083
        %2085 = vmatprep.mubr.f32.mxu0 0.0
        %2086 = vmatmul.mubr.f32.gmra.mrb[0].mxu0 %v1854
        %v2087 = vpop.f32.mrb[0].mxu0
        %v2088 = vadd.f32 %v239, %v2087
        %v2089 = vpop.f32.mrb[0].mxu0
        %v2090 = vadd.f32 %v243, %v2089
        %2091 = vmatprep.mubr.f32.mxu0 0.0
        %2092 = vmatmul.mubr.f32.gmra.mrb[0].mxu0 %v1857
        %v2093 = vpop.f32.mrb[0].mxu0
        %v2094 = vadd.f32 %v239, %v2093
        %v2095 = vpop.f32.mrb[0].mxu0
        %v2096 = vadd.f32 %v243, %v2095
        %2097 = vmatprep.mubr.f32.mxu0 0.0
        %2098 = vmatmul.mubr.f32.gmra.mrb[0].mxu0 %v1860
        %v2099 = vpop.f32.mrb[0].mxu0
        %v2100 = vadd.f32 %v239, %v2099
        %v2101 = vpop.f32.mrb[0].mxu0
        %v2102 = vadd.f32 %v243, %v2101
        %2103 = vmatprep.mubr.f32.mxu0 0.0
        %2104 = vmatmul.mubr.f32.gmra.mrb[0].mxu0 %v1863
        %v2105 = vpop.f32.mrb[0].mxu0
        %v2106 = vadd.f32 %v239, %v2105
        %v2107 = vpop.f32.mrb[0].mxu0
        %v2108 = vadd.f32 %v243, %v2107
        %2109 = vmatprep.mubr.f32.mxu0 0.0
        %2110 = vmatmul.mubr.f32.gmra.mrb[0].mxu0 %v1866
        %v2111 = vpop.f32.mrb[0].mxu0
        %v2112 = vadd.f32 %v239, %v2111
        %v2113 = vpop.f32.mrb[0].mxu0
        %v2114 = vadd.f32 %v243, %v2113
        %2115 = vmatprep.mubr.f32.mxu0 0.0
        %2116 = vmatmul.mubr.f32.gmra.mrb[0].mxu0 %v1869
        %v2117 = vpop.f32.mrb[0].mxu0
        %v2118 = vadd.f32 %v239, %v2117
        %v2119 = vpop.f32.mrb[0].mxu0
        %v2120 = vadd.f32 %v243, %v2119
        %2121 = vmatprep.mubr.f32.mxu0 0.0
        %2122 = vmatmul.mubr.f32.gmra.mrb[0].mxu0 %v1872
        %v2123 = vpop.f32.mrb[0].mxu0
        %v2124 = vadd.f32 %v239, %v2123
        %v2125 = vpop.f32.mrb[0].mxu0
        %v2126 = vadd.f32 %v243, %v2125
        %2127 = vmatprep.mubr.f32.mxu0 0.0
        %2128 = vmatmul.mubr.f32.gmra.mrb[0].mxu0 %v1875
        %v2129 = vpop.f32.mrb[0].mxu0
        %v2130 = vadd.f32 %v239, %v2129
        %v2131 = vpop.f32.mrb[0].mxu0
        %v2132 = vadd.f32 %v243, %v2131
        %2133 = vdwg.mxu0
        %s2134 = scalar_lea.vmem %s217, 1536 [#allocation7]
        %2135 = vst [vmem:[%s2134] sm:$0xff] %v1944
        %2136 = vst [vmem:[%s2134 + $0x8] sm:$0xff] %v1946
        %2137 = vst [vmem:[%s2134 + $0x10] sm:$0xff] %v1950
        %2138 = vst [vmem:[%s2134 + $0x18] sm:$0xff] %v1952
        %2139 = vst [vmem:[%s2134 + $0x20] sm:$0xff] %v1956
        %2140 = vst [vmem:[%s2134 + $0x28] sm:$0xff] %v1958
        %2141 = vst [vmem:[%s2134 + $0x30] sm:$0xff] %v1962
        %2142 = vst [vmem:[%s2134 + $0x38] sm:$0xff] %v1964
        %2143 = vst [vmem:[%s2134 + $0x40] sm:$0xff] %v1968
        %2144 = vst [vmem:[%s2134 + $0x48] sm:$0xff] %v1970
        %2145 = vst [vmem:[%s2134 + $0x50] sm:$0xff] %v1974
        %2146 = vst [vmem:[%s2134 + $0x58] sm:$0xff] %v1976
        %2147 = vst [vmem:[%s2134 + $0x60] sm:$0xff] %v1980
        %2148 = vst [vmem:[%s2134 + $0x68] sm:$0xff] %v1982
        %2149 = vst [vmem:[%s2134 + $0x70] sm:$0xff] %v1986
        %2150 = vst [vmem:[%s2134 + $0x78] sm:$0xff] %v1988
        %2151 = vst [vmem:[%s2134 + $0x80] sm:$0xff] %v1992
        %2152 = vst [vmem:[%s2134 + $0x88] sm:$0xff] %v1994
        %2153 = vst [vmem:[%s2134 + $0x90] sm:$0xff] %v1998
        %2154 = vst [vmem:[%s2134 + $0x98] sm:$0xff] %v2000
        %2155 = vst [vmem:[%s2134 + $0xa0] sm:$0xff] %v2004
        %2156 = vst [vmem:[%s2134 + $0xa8] sm:$0xff] %v2006
        %2157 = vst [vmem:[%s2134 + $0xb0] sm:$0xff] %v2010
        %2158 = vst [vmem:[%s2134 + $0xb8] sm:$0xff] %v2012
        %2159 = vst [vmem:[%s2134 + $0xc0] sm:$0xff] %v2016
        %2160 = vst [vmem:[%s2134 + $0xc8] sm:$0xff] %v2018
        %2161 = vst [vmem:[%s2134 + $0xd0] sm:$0xff] %v2022
        %2162 = vst [vmem:[%s2134 + $0xd8] sm:$0xff] %v2024
        %2163 = vst [vmem:[%s2134 + $0xe0] sm:$0xff] %v2028
        %2164 = vst [vmem:[%s2134 + $0xe8] sm:$0xff] %v2030
        %2165 = vst [vmem:[%s2134 + $0xf0] sm:$0xff] %v2034
        %2166 = vst [vmem:[%s2134 + $0xf8] sm:$0xff] %v2036
        %2167 = vst [vmem:[%s2134 + $0x100] sm:$0xff] %v2040
        %2168 = vst [vmem:[%s2134 + $0x108] sm:$0xff] %v2042
        %2169 = vst [vmem:[%s2134 + $0x110] sm:$0xff] %v2046
        %2170 = vst [vmem:[%s2134 + $0x118] sm:$0xff] %v2048
        %2171 = vst [vmem:[%s2134 + $0x120] sm:$0xff] %v2052
        %2172 = vst [vmem:[%s2134 + $0x128] sm:$0xff] %v2054
        %2173 = vst [vmem:[%s2134 + $0x130] sm:$0xff] %v2058
        %2174 = vst [vmem:[%s2134 + $0x138] sm:$0xff] %v2060
        %2175 = vst [vmem:[%s2134 + $0x140] sm:$0xff] %v2064
        %2176 = vst [vmem:[%s2134 + $0x148] sm:$0xff] %v2066
        %2177 = vst [vmem:[%s2134 + $0x150] sm:$0xff] %v2070
        %2178 = vst [vmem:[%s2134 + $0x158] sm:$0xff] %v2072
        %2179 = vst [vmem:[%s2134 + $0x160] sm:$0xff] %v2076
        %2180 = vst [vmem:[%s2134 + $0x168] sm:$0xff] %v2078
        %2181 = vst [vmem:[%s2134 + $0x170] sm:$0xff] %v2082
        %2182 = vst [vmem:[%s2134 + $0x178] sm:$0xff] %v2084
        %2183 = vst [vmem:[%s2134 + $0x180] sm:$0xff] %v2088
        %2184 = vst [vmem:[%s2134 + $0x188] sm:$0xff] %v2090
        %2185 = vst [vmem:[%s2134 + $0x190] sm:$0xff] %v2094
        %2186 = vst [vmem:[%s2134 + $0x198] sm:$0xff] %v2096
        %2187 = vst [vmem:[%s2134 + $0x1a0] sm:$0xff] %v2100
        %2188 = vst [vmem:[%s2134 + $0x1a8] sm:$0xff] %v2102
        %2189 = vst [vmem:[%s2134 + $0x1b0] sm:$0xff] %v2106
        %2190 = vst [vmem:[%s2134 + $0x1b8] sm:$0xff] %v2108
        %2191 = vst [vmem:[%s2134 + $0x1c0] sm:$0xff] %v2112
        %2192 = vst [vmem:[%s2134 + $0x1c8] sm:$0xff] %v2114
        %2193 = vst [vmem:[%s2134 + $0x1d0] sm:$0xff] %v2118
        %2194 = vst [vmem:[%s2134 + $0x1d8] sm:$0xff] %v2120
        %2195 = vst [vmem:[%s2134 + $0x1e0] sm:$0xff] %v2124
        %2196 = vst [vmem:[%s2134 + $0x1e8] sm:$0xff] %v2126
        %2197 = vst [vmem:[%s2134 + $0x1f0] sm:$0xff] %v2130
        %2198 = vst [vmem:[%s2134 + $0x1f8] sm:$0xff] %v2132
        %s2199 = sand.u32 %s111, 1
        %s2200 = scalar_lea.sflag [#allocation4], %s2199
        %s2201 = sand.u32 %s111, 1
        %s2202 = smul.addr %s2201, 2048
        %s2203 = scalar_lea.vmem [#allocation7], %s2202
        // Predicated region
        $region41: #{project_forward.1} parent=31 // pred_check
          %p2204 = pneg %p121
        $region42: #{project_forward.1} parent=31 // pred_check_branch
          %2206 = sbr.rel (%p2204) target = $region44
        $region43: #{project_forward.1} parent=31 // pred_region
          %s2207 = smul.u32 4, %s23
          %s2208 = smul.u32 32, %s24
          %s2210 = ssub.s32 32768, 32768
          %2211 = vsyncadd %s2200, %s2210
          %s2212 = smul.addr %s2208, 2
          %s2213 = smul.addr %s2207, 64
          %s2214 = sadd.s32 %s2212, %s2213
          %s2215 = smul.addr %s2214, 128
          %s2216 = scalar_lea.hbm %s3, %s2215
          %s2217 = sshll.u32 %s2203, 4
          %s2218 = int_to_ptr.vmem [resolvable:$true] %s2217
          %2223 = dma.vmem_to_hbm [thread:$0]  %s2218, 32768, %s2216, %s2200, 256, 256, 16
        $region44: #{project_forward.1} parent=31 // pred_fallthru
          _
      $region32: #{project_forward.1} parent=5 // pred_fallthru
        _
      %p2224 = scmp.le.s32.totalorder 2, %s14
      // Predicated region
      $region45: #{project_forward.1} parent=5 // pred_check
        %p2225 = pneg %p2224
      $region46: #{project_forward.1} parent=5 // pred_check_branch
        %2227 = sbr.rel (%p2225) target = $region48
      $region47: #{project_forward.1} parent=5 // pred_region
        %s2228 = ssub.s32 %s14, 2
        // Predicated region
        $region49: #{project_forward.1} parent=47 // pred_check
          %p2229 = pneg %p127
        $region50: #{project_forward.1} parent=47 // pred_check_branch
          %2231 = sbr.rel (%p2229) target = $region52
        $region51: #{project_forward.1} parent=47 // pred_region
          %s2232 = sand.u32 %s112, 1
          %s2233 = scalar_lea.sflag [#allocation4], %s2232
          %s2234 = sand.u32 %s112, 1
          %s2235 = smul.addr %s2234, 2048
          %s2236 = scalar_lea.vmem [#allocation7], %s2235
          %2237 = dma.done %s2233, 32768
        $region52: #{project_forward.1} parent=47 // pred_fallthru
          _
      $region48: #{project_forward.1} parent=5 // pred_fallthru
        _
    $region6: #{project_forward.1} parent=1 // loop_footer
      %s18 = sadd.s32 1, %s14
    $region7: #{project_forward.1} parent=1 // loop_footer_branch
      %13 = sbr.rel target = $region3
    $region8: #{project_forward.1} parent=1 // loop_exit
      _
    %2238 = vsyncpa [#allocation3], 1
    %s2239 = scalar_lea.sflag [#allocation3], 1
    %2240 = vsyncpa %s2239, 1
    %2241 = vsyncpa [#allocation6], 1
    %2242 = vsyncpa [#allocation4], 1
    %s2243 = scalar_lea.sflag [#allocation4], 1
    %2244 = vsyncpa %s2243, 1

</llo_original>
